<compile_context>
chip_gen: v6e
topology: v6e:2x2x1
jax: 0.10.0
libtpu: 0.0.40
codegen_flags: <defaults>
</compile_context>

<pallas_src>
import jax
import jax.numpy as jnp
import numpy as np
from jax.experimental import pallas as pl
from jax.experimental.pallas import tpu as pltpu

DEFAULT_MIN_BIN_WIDTH = 0.001
DEFAULT_MIN_BIN_HEIGHT = 0.001
SEARCHSORTED_EPS = 1e-6


def _softplus(x):
    # numerically stable softplus, same formula used in kernel and reference
    return jnp.maximum(x, 0.0) + jnp.log(1.0 + jnp.exp(-jnp.abs(x)))


def _recip(x):
    # EUP approx reciprocal seed + one Newton step: keeps the divide off the
    # VPU critical path while staying within ~1 ulp of exact f32 division.
    r = pl.reciprocal(x, approx=True)
    return r * (2.0 - x * r)


def _make_spline_kernel(K, n):
    P = 2 * K + 1

    def kernel(z1_ref, z2c_ref, w_ref, b_ref, x1_ref, logdet_ref):
        # Batch-on-lanes layout: every per-element map is (n, TILE_M).
        z1 = z1_ref[...]                         # (n, Mt) spline inputs in [0,1]

        # ---- conditioning net s(z2c): ONE fused matmul for all 2K+1 params ----
        # (P*n, D2C) @ (D2C, Mt) -> (P*n, Mt), default (single-pass) precision.
        y = jnp.dot(w_ref[...], z2c_ref[...],
                    preferred_element_type=jnp.float32)
        y = y + b_ref[...]                       # (P*n, 1) broadcasts over lanes

        def param(p):                            # sublane-aligned static slice
            return y[p * n:(p + 1) * n, :]

        uheights = [param(k) for k in range(K + 1)]      # K+1 unnormalized heights
        uwidths = [param(K + 1 + k) for k in range(K)]   # K   unnormalized widths

        # ---- widths: softmax over the K bins, then min-width floor ----
        wmax = uwidths[0]
        for k in range(1, K):
            wmax = jnp.maximum(wmax, uwidths[k])
        wexp = [jnp.exp(w - wmax) for w in uwidths]
        wsum = wexp[0]
        for k in range(1, K):
            wsum = wsum + wexp[k]
        w_scale = (1.0 - DEFAULT_MIN_BIN_WIDTH * K) * _recip(wsum)
        widths = [DEFAULT_MIN_BIN_WIDTH + we * w_scale for we in wexp]

        # ---- heights: softplus, trapezoid-area normalization, min floor ----
        hsp = [_softplus(h) + 0.001 for h in uheights]
        area = (hsp[0] + hsp[1]) * 0.5 * widths[0]
        for k in range(1, K):
            area = area + (hsp[k] + hsp[k + 1]) * 0.5 * widths[k]
        h_scale = (1.0 - DEFAULT_MIN_BIN_HEIGHT) * _recip(area)
        heights = [DEFAULT_MIN_BIN_HEIGHT + h * h_scale for h in hsp]

        # ---- fused cumsum + searchsorted + gather: one unrolled k-loop ----
        # TODO(synk): the torch code host-prints "Input outside domain"; here
        # out-of-range inputs are simply clamped to the boundary bins.
        zeros = jnp.zeros_like(z1)
        sel_loc = zeros
        sel_w = zeros
        sel_cdf = zeros
        sel_lh = zeros
        sel_rh = zeros
        left = zeros          # running left bin edge  (cumsum of widths)
        leftcdf = zeros       # running left bin cdf   (cumsum of trapezoids)
        ge_cur = None         # z1 >= left edge of bin k (treated True for k==0)
        for k in range(K):
            w_k = widths[k]
            right = left + w_k
            cond = ge_cur
            if k < K - 1:
                ge_next = z1 >= right
                below = jnp.logical_not(ge_next)
                cond = below if cond is None else jnp.logical_and(cond, below)
            else:
                ge_next = None    # last bin: clamp idx to K-1 (matches reference in-domain)
            if cond is None:      # K == 1: the single bin covers everything
                sel_loc, sel_w, sel_cdf = left, w_k, leftcdf
                sel_lh, sel_rh = heights[k], heights[k + 1]
            else:
                sel_loc = jnp.where(cond, left, sel_loc)
                sel_w = jnp.where(cond, w_k, sel_w)
                sel_cdf = jnp.where(cond, leftcdf, sel_cdf)
                sel_lh = jnp.where(cond, heights[k], sel_lh)
                sel_rh = jnp.where(cond, heights[k + 1], sel_rh)
            leftcdf = leftcdf + (heights[k] + heights[k + 1]) * 0.5 * w_k
            left = right
            ge_cur = ge_next

        # ---- quadratic evaluation + log|det J| ----
        a = 0.5 * (sel_rh - sel_lh) * sel_w
        b_ = sel_lh * sel_w
        alpha = (z1 - sel_loc) * _recip(sel_w)
        out = a * alpha * alpha + b_ * alpha + sel_cdf
        out = jnp.clip(out, 0.0, 1.0)
        logabsdet = jnp.log(alpha * (sel_rh - sel_lh) + sel_lh)

        x1_ref[...] = out
        # lane-dense (1, Mt) logdet: cheap sublane reduction over the n rows
        logdet_ref[...] = jnp.sum(logabsdet, axis=0, keepdims=True)

    return kernel


def quadratics_spline_forward(c, z, W, b, n, K, tile_m=None):
    """Pallas version of QuadraticsSpline.forward with reverse=False.

    c: (M, input_dim), z: (M, data_dim)
    W: (D2C, n*(2K+1)), b: (n*(2K+1),)  -- the single Linear layer `s`.
    Returns (x, log_det) with x = concat([z2, spline(z1)], axis=1), log_det (M,).
    """
    M, data_dim = z.shape
    P = 2 * K + 1
    z1 = z[:, :n]
    z2 = z[:, n:]
    z2c = jnp.concatenate([z2, c], axis=1)
    D2C = z2c.shape[1]

    if tile_m is None:
        # 128-lane tiles keep every (n, TILE_M) map at one vreg; small enough
        # for v7x's 64 MiB VMEM with large margin, big enough to amortize the
        # per-grid-step overhead.
        tile_m = 128 if M >= 128 else M
    Mp = ((M + tile_m - 1) // tile_m) * tile_m

    # Batch-on-lanes layout: (feature, batch); pad batch to a tile multiple
    # with in-domain dummy rows so no NaNs are produced, then slice off.
    z1t = z1.T                                    # (n, M)
    z2ct = z2c.T                                  # (D2C, M)
    if Mp != M:
        z1t = jnp.pad(z1t, ((0, 0), (0, Mp - M)), constant_values=0.5)
        z2ct = jnp.pad(z2ct, ((0, 0), (0, Mp - M)))

    # p-major weight layout: row p*n + j of (Wt @ z2c^T) is parameter p of
    # coordinate j, i.e. y.reshape(M, n, P)[:, j, p] of the original Linear.
    Wt = jnp.transpose(W.reshape(D2C, n, P), (2, 1, 0)).reshape(P * n, D2C)
    bt = jnp.transpose(b.reshape(n, P), (1, 0)).reshape(P * n, 1)

    kernel = _make_spline_kernel(K, n)
    x1t, logdet = pl.pallas_call(
        kernel,
        out_shape=(jax.ShapeDtypeStruct((n, Mp), jnp.float32),
                   jax.ShapeDtypeStruct((1, Mp), jnp.float32)),
        grid=(Mp // tile_m,),
        in_specs=[
            pl.BlockSpec((n, tile_m), lambda i: (0, i)),
            pl.BlockSpec((D2C, tile_m), lambda i: (0, i)),
            pl.BlockSpec((P * n, D2C), lambda i: (0, 0)),
            pl.BlockSpec((P * n, 1), lambda i: (0, 0)),
        ],
        out_specs=(
            pl.BlockSpec((n, tile_m), lambda i: (0, i)),
            pl.BlockSpec((1, tile_m), lambda i: (0, i)),
        ),
        compiler_params=pltpu.CompilerParams(
            dimension_semantics=("parallel",),
            vmem_limit_bytes=32 * 1024 * 1024),
    )(z1t, z2ct, Wt, bt)

    x1 = x1t[:, :M].T
    log_det = logdet[0, :M]
    x = jnp.concatenate([z2, x1], axis=1)
    return x, log_det


def reference_forward(c, z, W, b, n, K):
    """Pure-JAX transcription of the PyTorch forward (reverse=False)."""
    M, data_dim = z.shape
    P = 2 * K + 1
    z1 = z[:, :n]
    z2 = z[:, n:]
    z2c = jnp.concatenate([z2, c], axis=1)
    # default matmul precision, same rounding regime as the kernel's fused dot
    y = jnp.dot(z2c, W) + b
    sv = y.reshape(M, n, P)
    uh = sv[..., :K + 1]
    uw = sv[..., K + 1:]

    inputs = z1
    widths = jax.nn.softmax(uw, axis=-1)
    widths = DEFAULT_MIN_BIN_WIDTH + (1.0 - DEFAULT_MIN_BIN_WIDTH * K) * widths
    h = _softplus(uh) + 0.001
    area = jnp.sum((h[..., :-1] + h[..., 1:]) / 2.0 * widths,
                   axis=-1, keepdims=True)
    heights = h / area
    heights = DEFAULT_MIN_BIN_HEIGHT + (1.0 - DEFAULT_MIN_BIN_HEIGHT) * heights

    cdf = jnp.cumsum((heights[..., :-1] + heights[..., 1:]) / 2.0 * widths,
                     axis=-1)
    cdf = cdf.at[..., -1].set(1.0)
    cdf = jnp.pad(cdf, ((0, 0), (0, 0), (1, 0)))
    locs = jnp.cumsum(widths, axis=-1)
    locs = locs.at[..., -1].set(1.0)
    locs = jnp.pad(locs, ((0, 0), (0, 0), (1, 0)))

    locs_eps = locs.at[..., -1].add(SEARCHSORTED_EPS)
    idx = jnp.sum((inputs[..., None] >= locs_eps).astype(jnp.int32),
                  axis=-1) - 1

    def gather(arr, ix):
        return jnp.take_along_axis(arr, ix[..., None], axis=-1)[..., 0]

    in_loc = gather(locs, idx)
    in_w = gather(widths, idx)
    in_cdf = gather(cdf, idx)
    lh = gather(heights, idx)
    rh = gather(heights, idx + 1)

    a = 0.5 * (rh - lh) * in_w
    bb = lh * in_w
    cc = in_cdf
    alpha = (inputs - in_loc) / in_w
    out = jnp.clip(a * alpha ** 2 + bb * alpha + cc, 0.0, 1.0)
    lad = jnp.log(alpha * (rh - lh) + lh)

    x = jnp.concatenate([z2, out], axis=1)
    return x, lad.sum(axis=1)


if __name__ == "__main__":
    # Shapes consistent with the module's forward:
    #   c: (M, input_dim), z: (M, data_dim), n coords transformed, K bins.
    M = 256          # batch (2 grid tiles of 128 lanes each)
    input_dim = 4    # conditioning dim
    data_dim = 16    # data dim (output_dim)
    n = 8            # number of coordinates passed through the spline
    K = 8            # number of spline bins
    P = 2 * K + 1
    D2C = data_dim - n + input_dim

    key = jax.random.PRNGKey(0)
    kc, kz, kw, kb = jax.random.split(key, 4)

    c = jax.random.normal(kc, (M, input_dim), dtype=jnp.float32)
    # z1 must lie in the spline domain [0, 1]; use uniforms for all of z.
    z = jax.random.uniform(kz, (M, data_dim), dtype=jnp.float32,
                           minval=0.01, maxval=0.99)

    # Deterministic init of the conditioning net s (single Linear layer).
    W = (jax.random.normal(kw, (D2C, n * P), dtype=jnp.float32)
         / jnp.sqrt(jnp.float32(D2C)))
    b = 0.1 * jax.random.normal(kb, (n * P,), dtype=jnp.float32)

    x, log_det = quadratics_spline_forward(c, z, W, b, n, K)
    jax.block_until_ready((x, log_det))

    x_ref, log_det_ref = reference_forward(c, z, W, b, n, K)
    np.testing.assert_allclose(np.asarray(x), np.asarray(x_ref),
                               rtol=5e-3, atol=1e-3)
    np.testing.assert_allclose(np.asarray(log_det), np.asarray(log_det_ref),
                               rtol=5e-3, atol=2e-3)

    print("KERNEL_OK")
</pallas_src>

<mosaic_0001>
module attributes {stable_mosaic.version = 11 : i64} {
  func.func @kernel(%arg0: i32, %arg1: memref<8x128xf32, #tpu.memory_space<vmem>>, %arg2: memref<12x128xf32, #tpu.memory_space<vmem>>, %arg3: memref<136x12xf32, #tpu.memory_space<vmem>>, %arg4: memref<136x1xf32, #tpu.memory_space<vmem>>, %arg5: memref<8x128xf32, #tpu.memory_space<vmem>>, %arg6: memref<1x128xf32, #tpu.memory_space<vmem>>) attributes {dimension_semantics = [#tpu.dimension_semantics<parallel>], iteration_bounds = array<i64: 2>, scalar_prefetch = 0 : i64, scratch_operands = 0 : i64, tpu.core_type = #tpu.core_type<tc>, window_params = [{transform_indices = @transform_0, window_bounds = array<i64: 8, 128>}, {transform_indices = @transform_1, window_bounds = array<i64: 12, 128>}, {pipeline_mode = #tpu.pipeline_mode<synchronous>, transform_indices = @transform_2, window_bounds = array<i64: 136, 12>}, {pipeline_mode = #tpu.pipeline_mode<synchronous>, transform_indices = @transform_3, window_bounds = array<i64: 136, 1>}, {transform_indices = @transform_4, window_bounds = array<i64: 8, 128>}, {transform_indices = @transform_5, window_bounds = array<i64: 1, 128>}]} {
    %c0 = arith.constant 0 : index
    %c0_0 = arith.constant 0 : index
    %0 = vector.load %arg1[%c0, %c0_0] : memref<8x128xf32, #tpu.memory_space<vmem>>, vector<8x128xf32>
    %c0_1 = arith.constant 0 : index
    %c0_2 = arith.constant 0 : index
    %1 = vector.load %arg3[%c0_1, %c0_2] : memref<136x12xf32, #tpu.memory_space<vmem>>, vector<136x12xf32>
    %c0_3 = arith.constant 0 : index
    %c0_4 = arith.constant 0 : index
    %2 = vector.load %arg2[%c0_3, %c0_4] : memref<12x128xf32, #tpu.memory_space<vmem>>, vector<12x128xf32>
    %cst = arith.constant dense<0.000000e+00> : vector<136x128xf32>
    %3 = tpu.matmul %1, %2, %cst {dimension_numbers = #tpu.dot_dimension_numbers<[1], [0], [0], [1], [0, 0, 1, 1], [], []>} : vector<136x12xf32>, vector<12x128xf32>, vector<136x128xf32> -> vector<136x128xf32>
    %c0_5 = arith.constant 0 : index
    %c0_6 = arith.constant 0 : index
    %4 = vector.load %arg4[%c0_5, %c0_6] : memref<136x1xf32, #tpu.memory_space<vmem>>, vector<136x1xf32>
    %5 = vector.broadcast %4 : vector<136x1xf32> to vector<136x128xf32>
    %6 = arith.addf %3, %5 : vector<136x128xf32>
    %7 = vector.extract_strided_slice %6 {offsets = [0, 0], sizes = [8, 128], strides = [1, 1]} : vector<136x128xf32> to vector<8x128xf32>
    %8 = vector.extract_strided_slice %6 {offsets = [8, 0], sizes = [8, 128], strides = [1, 1]} : vector<136x128xf32> to vector<8x128xf32>
    %9 = vector.extract_strided_slice %6 {offsets = [16, 0], sizes = [8, 128], strides = [1, 1]} : vector<136x128xf32> to vector<8x128xf32>
    %10 = vector.extract_strided_slice %6 {offsets = [24, 0], sizes = [8, 128], strides = [1, 1]} : vector<136x128xf32> to vector<8x128xf32>
    %11 = vector.extract_strided_slice %6 {offsets = [32, 0], sizes = [8, 128], strides = [1, 1]} : vector<136x128xf32> to vector<8x128xf32>
    %12 = vector.extract_strided_slice %6 {offsets = [40, 0], sizes = [8, 128], strides = [1, 1]} : vector<136x128xf32> to vector<8x128xf32>
    %13 = vector.extract_strided_slice %6 {offsets = [48, 0], sizes = [8, 128], strides = [1, 1]} : vector<136x128xf32> to vector<8x128xf32>
    %14 = vector.extract_strided_slice %6 {offsets = [56, 0], sizes = [8, 128], strides = [1, 1]} : vector<136x128xf32> to vector<8x128xf32>
    %15 = vector.extract_strided_slice %6 {offsets = [64, 0], sizes = [8, 128], strides = [1, 1]} : vector<136x128xf32> to vector<8x128xf32>
    %16 = vector.extract_strided_slice %6 {offsets = [72, 0], sizes = [8, 128], strides = [1, 1]} : vector<136x128xf32> to vector<8x128xf32>
    %17 = vector.extract_strided_slice %6 {offsets = [80, 0], sizes = [8, 128], strides = [1, 1]} : vector<136x128xf32> to vector<8x128xf32>
    %18 = vector.extract_strided_slice %6 {offsets = [88, 0], sizes = [8, 128], strides = [1, 1]} : vector<136x128xf32> to vector<8x128xf32>
    %19 = vector.extract_strided_slice %6 {offsets = [96, 0], sizes = [8, 128], strides = [1, 1]} : vector<136x128xf32> to vector<8x128xf32>
    %20 = vector.extract_strided_slice %6 {offsets = [104, 0], sizes = [8, 128], strides = [1, 1]} : vector<136x128xf32> to vector<8x128xf32>
    %21 = vector.extract_strided_slice %6 {offsets = [112, 0], sizes = [8, 128], strides = [1, 1]} : vector<136x128xf32> to vector<8x128xf32>
    %22 = vector.extract_strided_slice %6 {offsets = [120, 0], sizes = [8, 128], strides = [1, 1]} : vector<136x128xf32> to vector<8x128xf32>
    %23 = vector.extract_strided_slice %6 {offsets = [128, 0], sizes = [8, 128], strides = [1, 1]} : vector<136x128xf32> to vector<8x128xf32>
    %24 = arith.maximumf %16, %17 : vector<8x128xf32>
    %25 = arith.maximumf %24, %18 : vector<8x128xf32>
    %26 = arith.maximumf %25, %19 : vector<8x128xf32>
    %27 = arith.maximumf %26, %20 : vector<8x128xf32>
    %28 = arith.maximumf %27, %21 : vector<8x128xf32>
    %29 = arith.maximumf %28, %22 : vector<8x128xf32>
    %30 = arith.maximumf %29, %23 : vector<8x128xf32>
    %31 = arith.subf %16, %30 : vector<8x128xf32>
    %32 = math.exp %31 : vector<8x128xf32>
    %33 = arith.subf %17, %30 : vector<8x128xf32>
    %34 = math.exp %33 : vector<8x128xf32>
    %35 = arith.subf %18, %30 : vector<8x128xf32>
    %36 = math.exp %35 : vector<8x128xf32>
    %37 = arith.subf %19, %30 : vector<8x128xf32>
    %38 = math.exp %37 : vector<8x128xf32>
    %39 = arith.subf %20, %30 : vector<8x128xf32>
    %40 = math.exp %39 : vector<8x128xf32>
    %41 = arith.subf %21, %30 : vector<8x128xf32>
    %42 = math.exp %41 : vector<8x128xf32>
    %43 = arith.subf %22, %30 : vector<8x128xf32>
    %44 = math.exp %43 : vector<8x128xf32>
    %45 = arith.subf %23, %30 : vector<8x128xf32>
    %46 = math.exp %45 : vector<8x128xf32>
    %47 = arith.addf %32, %34 : vector<8x128xf32>
    %48 = arith.addf %47, %36 : vector<8x128xf32>
    %49 = arith.addf %48, %38 : vector<8x128xf32>
    %50 = arith.addf %49, %40 : vector<8x128xf32>
    %51 = arith.addf %50, %42 : vector<8x128xf32>
    %52 = arith.addf %51, %44 : vector<8x128xf32>
    %53 = arith.addf %52, %46 : vector<8x128xf32>
    %54 = tpu.reciprocal %53 {approx = true} : vector<8x128xf32> -> vector<8x128xf32>
    %55 = arith.mulf %53, %54 : vector<8x128xf32>
    %cst_7 = arith.constant 2.000000e+00 : f32
    %56 = vector.broadcast %cst_7 : f32 to vector<8x128xf32>
    %57 = arith.subf %56, %55 : vector<8x128xf32>
    %58 = arith.mulf %54, %57 : vector<8x128xf32>
    %cst_8 = arith.constant 0.991999983 : f32
    %59 = vector.broadcast %cst_8 : f32 to vector<8x128xf32>
    %60 = arith.mulf %59, %58 : vector<8x128xf32>
    %61 = arith.mulf %32, %60 : vector<8x128xf32>
    %cst_9 = arith.constant 1.000000e-03 : f32
    %62 = vector.broadcast %cst_9 : f32 to vector<8x128xf32>
    %63 = arith.addf %62, %61 : vector<8x128xf32>
    %64 = arith.mulf %34, %60 : vector<8x128xf32>
    %cst_10 = arith.constant 1.000000e-03 : f32
    %65 = vector.broadcast %cst_10 : f32 to vector<8x128xf32>
    %66 = arith.addf %65, %64 : vector<8x128xf32>
    %67 = arith.mulf %36, %60 : vector<8x128xf32>
    %cst_11 = arith.constant 1.000000e-03 : f32
    %68 = vector.broadcast %cst_11 : f32 to vector<8x128xf32>
    %69 = arith.addf %68, %67 : vector<8x128xf32>
    %70 = arith.mulf %38, %60 : vector<8x128xf32>
    %cst_12 = arith.constant 1.000000e-03 : f32
    %71 = vector.broadcast %cst_12 : f32 to vector<8x128xf32>
    %72 = arith.addf %71, %70 : vector<8x128xf32>
    %73 = arith.mulf %40, %60 : vector<8x128xf32>
    %cst_13 = arith.constant 1.000000e-03 : f32
    %74 = vector.broadcast %cst_13 : f32 to vector<8x128xf32>
    %75 = arith.addf %74, %73 : vector<8x128xf32>
    %76 = arith.mulf %42, %60 : vector<8x128xf32>
    %cst_14 = arith.constant 1.000000e-03 : f32
    %77 = vector.broadcast %cst_14 : f32 to vector<8x128xf32>
    %78 = arith.addf %77, %76 : vector<8x128xf32>
    %79 = arith.mulf %44, %60 : vector<8x128xf32>
    %cst_15 = arith.constant 1.000000e-03 : f32
    %80 = vector.broadcast %cst_15 : f32 to vector<8x128xf32>
    %81 = arith.addf %80, %79 : vector<8x128xf32>
    %82 = arith.mulf %46, %60 : vector<8x128xf32>
    %cst_16 = arith.constant 1.000000e-03 : f32
    %83 = vector.broadcast %cst_16 : f32 to vector<8x128xf32>
    %84 = arith.addf %83, %82 : vector<8x128xf32>
    %cst_17 = arith.constant 0.000000e+00 : f32
    %85 = vector.broadcast %cst_17 : f32 to vector<8x128xf32>
    %86 = arith.maximumf %7, %85 : vector<8x128xf32>
    %87 = math.absf %7 : vector<8x128xf32>
    %cst_18 = arith.constant 0.000000e+00 : f32
    %88 = vector.broadcast %cst_18 : f32 to vector<8x128xf32>
    %89 = arith.subf %88, %87 : vector<8x128xf32>
    %90 = math.exp %89 : vector<8x128xf32>
    %cst_19 = arith.constant 1.000000e+00 : f32
    %91 = vector.broadcast %cst_19 : f32 to vector<8x128xf32>
    %92 = arith.addf %91, %90 : vector<8x128xf32>
    %93 = math.log %92 : vector<8x128xf32>
    %94 = arith.addf %86, %93 : vector<8x128xf32>
    %cst_20 = arith.constant 1.000000e-03 : f32
    %95 = vector.broadcast %cst_20 : f32 to vector<8x128xf32>
    %96 = arith.addf %94, %95 : vector<8x128xf32>
    %cst_21 = arith.constant 0.000000e+00 : f32
    %97 = vector.broadcast %cst_21 : f32 to vector<8x128xf32>
    %98 = arith.maximumf %8, %97 : vector<8x128xf32>
    %99 = math.absf %8 : vector<8x128xf32>
    %cst_22 = arith.constant 0.000000e+00 : f32
    %100 = vector.broadcast %cst_22 : f32 to vector<8x128xf32>
    %101 = arith.subf %100, %99 : vector<8x128xf32>
    %102 = math.exp %101 : vector<8x128xf32>
    %cst_23 = arith.constant 1.000000e+00 : f32
    %103 = vector.broadcast %cst_23 : f32 to vector<8x128xf32>
    %104 = arith.addf %103, %102 : vector<8x128xf32>
    %105 = math.log %104 : vector<8x128xf32>
    %106 = arith.addf %98, %105 : vector<8x128xf32>
    %cst_24 = arith.constant 1.000000e-03 : f32
    %107 = vector.broadcast %cst_24 : f32 to vector<8x128xf32>
    %108 = arith.addf %106, %107 : vector<8x128xf32>
    %cst_25 = arith.constant 0.000000e+00 : f32
    %109 = vector.broadcast %cst_25 : f32 to vector<8x128xf32>
    %110 = arith.maximumf %9, %109 : vector<8x128xf32>
    %111 = math.absf %9 : vector<8x128xf32>
    %cst_26 = arith.constant 0.000000e+00 : f32
    %112 = vector.broadcast %cst_26 : f32 to vector<8x128xf32>
    %113 = arith.subf %112, %111 : vector<8x128xf32>
    %114 = math.exp %113 : vector<8x128xf32>
    %cst_27 = arith.constant 1.000000e+00 : f32
    %115 = vector.broadcast %cst_27 : f32 to vector<8x128xf32>
    %116 = arith.addf %115, %114 : vector<8x128xf32>
    %117 = math.log %116 : vector<8x128xf32>
    %118 = arith.addf %110, %117 : vector<8x128xf32>
    %cst_28 = arith.constant 1.000000e-03 : f32
    %119 = vector.broadcast %cst_28 : f32 to vector<8x128xf32>
    %120 = arith.addf %118, %119 : vector<8x128xf32>
    %cst_29 = arith.constant 0.000000e+00 : f32
    %121 = vector.broadcast %cst_29 : f32 to vector<8x128xf32>
    %122 = arith.maximumf %10, %121 : vector<8x128xf32>
    %123 = math.absf %10 : vector<8x128xf32>
    %cst_30 = arith.constant 0.000000e+00 : f32
    %124 = vector.broadcast %cst_30 : f32 to vector<8x128xf32>
    %125 = arith.subf %124, %123 : vector<8x128xf32>
    %126 = math.exp %125 : vector<8x128xf32>
    %cst_31 = arith.constant 1.000000e+00 : f32
    %127 = vector.broadcast %cst_31 : f32 to vector<8x128xf32>
    %128 = arith.addf %127, %126 : vector<8x128xf32>
    %129 = math.log %128 : vector<8x128xf32>
    %130 = arith.addf %122, %129 : vector<8x128xf32>
    %cst_32 = arith.constant 1.000000e-03 : f32
    %131 = vector.broadcast %cst_32 : f32 to vector<8x128xf32>
    %132 = arith.addf %130, %131 : vector<8x128xf32>
    %cst_33 = arith.constant 0.000000e+00 : f32
    %133 = vector.broadcast %cst_33 : f32 to vector<8x128xf32>
    %134 = arith.maximumf %11, %133 : vector<8x128xf32>
    %135 = math.absf %11 : vector<8x128xf32>
    %cst_34 = arith.constant 0.000000e+00 : f32
    %136 = vector.broadcast %cst_34 : f32 to vector<8x128xf32>
    %137 = arith.subf %136, %135 : vector<8x128xf32>
    %138 = math.exp %137 : vector<8x128xf32>
    %cst_35 = arith.constant 1.000000e+00 : f32
    %139 = vector.broadcast %cst_35 : f32 to vector<8x128xf32>
    %140 = arith.addf %139, %138 : vector<8x128xf32>
    %141 = math.log %140 : vector<8x128xf32>
    %142 = arith.addf %134, %141 : vector<8x128xf32>
    %cst_36 = arith.constant 1.000000e-03 : f32
    %143 = vector.broadcast %cst_36 : f32 to vector<8x128xf32>
    %144 = arith.addf %142, %143 : vector<8x128xf32>
    %cst_37 = arith.constant 0.000000e+00 : f32
    %145 = vector.broadcast %cst_37 : f32 to vector<8x128xf32>
    %146 = arith.maximumf %12, %145 : vector<8x128xf32>
    %147 = math.absf %12 : vector<8x128xf32>
    %cst_38 = arith.constant 0.000000e+00 : f32
    %148 = vector.broadcast %cst_38 : f32 to vector<8x128xf32>
    %149 = arith.subf %148, %147 : vector<8x128xf32>
    %150 = math.exp %149 : vector<8x128xf32>
    %cst_39 = arith.constant 1.000000e+00 : f32
    %151 = vector.broadcast %cst_39 : f32 to vector<8x128xf32>
    %152 = arith.addf %151, %150 : vector<8x128xf32>
    %153 = math.log %152 : vector<8x128xf32>
    %154 = arith.addf %146, %153 : vector<8x128xf32>
    %cst_40 = arith.constant 1.000000e-03 : f32
    %155 = vector.broadcast %cst_40 : f32 to vector<8x128xf32>
    %156 = arith.addf %154, %155 : vector<8x128xf32>
    %cst_41 = arith.constant 0.000000e+00 : f32
    %157 = vector.broadcast %cst_41 : f32 to vector<8x128xf32>
    %158 = arith.maximumf %13, %157 : vector<8x128xf32>
    %159 = math.absf %13 : vector<8x128xf32>
    %cst_42 = arith.constant 0.000000e+00 : f32
    %160 = vector.broadcast %cst_42 : f32 to vector<8x128xf32>
    %161 = arith.subf %160, %159 : vector<8x128xf32>
    %162 = math.exp %161 : vector<8x128xf32>
    %cst_43 = arith.constant 1.000000e+00 : f32
    %163 = vector.broadcast %cst_43 : f32 to vector<8x128xf32>
    %164 = arith.addf %163, %162 : vector<8x128xf32>
    %165 = math.log %164 : vector<8x128xf32>
    %166 = arith.addf %158, %165 : vector<8x128xf32>
    %cst_44 = arith.constant 1.000000e-03 : f32
    %167 = vector.broadcast %cst_44 : f32 to vector<8x128xf32>
    %168 = arith.addf %166, %167 : vector<8x128xf32>
    %cst_45 = arith.constant 0.000000e+00 : f32
    %169 = vector.broadcast %cst_45 : f32 to vector<8x128xf32>
    %170 = arith.maximumf %14, %169 : vector<8x128xf32>
    %171 = math.absf %14 : vector<8x128xf32>
    %cst_46 = arith.constant 0.000000e+00 : f32
    %172 = vector.broadcast %cst_46 : f32 to vector<8x128xf32>
    %173 = arith.subf %172, %171 : vector<8x128xf32>
    %174 = math.exp %173 : vector<8x128xf32>
    %cst_47 = arith.constant 1.000000e+00 : f32
    %175 = vector.broadcast %cst_47 : f32 to vector<8x128xf32>
    %176 = arith.addf %175, %174 : vector<8x128xf32>
    %177 = math.log %176 : vector<8x128xf32>
    %178 = arith.addf %170, %177 : vector<8x128xf32>
    %cst_48 = arith.constant 1.000000e-03 : f32
    %179 = vector.broadcast %cst_48 : f32 to vector<8x128xf32>
    %180 = arith.addf %178, %179 : vector<8x128xf32>
    %cst_49 = arith.constant 0.000000e+00 : f32
    %181 = vector.broadcast %cst_49 : f32 to vector<8x128xf32>
    %182 = arith.maximumf %15, %181 : vector<8x128xf32>
    %183 = math.absf %15 : vector<8x128xf32>
    %cst_50 = arith.constant 0.000000e+00 : f32
    %184 = vector.broadcast %cst_50 : f32 to vector<8x128xf32>
    %185 = arith.subf %184, %183 : vector<8x128xf32>
    %186 = math.exp %185 : vector<8x128xf32>
    %cst_51 = arith.constant 1.000000e+00 : f32
    %187 = vector.broadcast %cst_51 : f32 to vector<8x128xf32>
    %188 = arith.addf %187, %186 : vector<8x128xf32>
    %189 = math.log %188 : vector<8x128xf32>
    %190 = arith.addf %182, %189 : vector<8x128xf32>
    %cst_52 = arith.constant 1.000000e-03 : f32
    %191 = vector.broadcast %cst_52 : f32 to vector<8x128xf32>
    %192 = arith.addf %190, %191 : vector<8x128xf32>
    %193 = arith.addf %96, %108 : vector<8x128xf32>
    %cst_53 = arith.constant 5.000000e-01 : f32
    %194 = vector.broadcast %cst_53 : f32 to vector<8x128xf32>
    %195 = arith.mulf %193, %194 : vector<8x128xf32>
    %196 = arith.mulf %195, %63 : vector<8x128xf32>
    %197 = arith.addf %108, %120 : vector<8x128xf32>
    %cst_54 = arith.constant 5.000000e-01 : f32
    %198 = vector.broadcast %cst_54 : f32 to vector<8x128xf32>
    %199 = arith.mulf %197, %198 : vector<8x128xf32>
    %200 = arith.mulf %199, %66 : vector<8x128xf32>
    %201 = arith.addf %196, %200 : vector<8x128xf32>
    %202 = arith.addf %120, %132 : vector<8x128xf32>
    %cst_55 = arith.constant 5.000000e-01 : f32
    %203 = vector.broadcast %cst_55 : f32 to vector<8x128xf32>
    %204 = arith.mulf %202, %203 : vector<8x128xf32>
    %205 = arith.mulf %204, %69 : vector<8x128xf32>
    %206 = arith.addf %201, %205 : vector<8x128xf32>
    %207 = arith.addf %132, %144 : vector<8x128xf32>
    %cst_56 = arith.constant 5.000000e-01 : f32
    %208 = vector.broadcast %cst_56 : f32 to vector<8x128xf32>
    %209 = arith.mulf %207, %208 : vector<8x128xf32>
    %210 = arith.mulf %209, %72 : vector<8x128xf32>
    %211 = arith.addf %206, %210 : vector<8x128xf32>
    %212 = arith.addf %144, %156 : vector<8x128xf32>
    %cst_57 = arith.constant 5.000000e-01 : f32
    %213 = vector.broadcast %cst_57 : f32 to vector<8x128xf32>
    %214 = arith.mulf %212, %213 : vector<8x128xf32>
    %215 = arith.mulf %214, %75 : vector<8x128xf32>
    %216 = arith.addf %211, %215 : vector<8x128xf32>
    %217 = arith.addf %156, %168 : vector<8x128xf32>
    %cst_58 = arith.constant 5.000000e-01 : f32
    %218 = vector.broadcast %cst_58 : f32 to vector<8x128xf32>
    %219 = arith.mulf %217, %218 : vector<8x128xf32>
    %220 = arith.mulf %219, %78 : vector<8x128xf32>
    %221 = arith.addf %216, %220 : vector<8x128xf32>
    %222 = arith.addf %168, %180 : vector<8x128xf32>
    %cst_59 = arith.constant 5.000000e-01 : f32
    %223 = vector.broadcast %cst_59 : f32 to vector<8x128xf32>
    %224 = arith.mulf %222, %223 : vector<8x128xf32>
    %225 = arith.mulf %224, %81 : vector<8x128xf32>
    %226 = arith.addf %221, %225 : vector<8x128xf32>
    %227 = arith.addf %180, %192 : vector<8x128xf32>
    %cst_60 = arith.constant 5.000000e-01 : f32
    %228 = vector.broadcast %cst_60 : f32 to vector<8x128xf32>
    %229 = arith.mulf %227, %228 : vector<8x128xf32>
    %230 = arith.mulf %229, %84 : vector<8x128xf32>
    %231 = arith.addf %226, %230 : vector<8x128xf32>
    %232 = tpu.reciprocal %231 {approx = true} : vector<8x128xf32> -> vector<8x128xf32>
    %233 = arith.mulf %231, %232 : vector<8x128xf32>
    %cst_61 = arith.constant 2.000000e+00 : f32
    %234 = vector.broadcast %cst_61 : f32 to vector<8x128xf32>
    %235 = arith.subf %234, %233 : vector<8x128xf32>
    %236 = arith.mulf %232, %235 : vector<8x128xf32>
    %cst_62 = arith.constant 9.990000e-01 : f32
    %237 = vector.broadcast %cst_62 : f32 to vector<8x128xf32>
    %238 = arith.mulf %237, %236 : vector<8x128xf32>
    %239 = arith.mulf %96, %238 : vector<8x128xf32>
    %cst_63 = arith.constant 1.000000e-03 : f32
    %240 = vector.broadcast %cst_63 : f32 to vector<8x128xf32>
    %241 = arith.addf %240, %239 : vector<8x128xf32>
    %242 = arith.mulf %108, %238 : vector<8x128xf32>
    %cst_64 = arith.constant 1.000000e-03 : f32
    %243 = vector.broadcast %cst_64 : f32 to vector<8x128xf32>
    %244 = arith.addf %243, %242 : vector<8x128xf32>
    %245 = arith.mulf %120, %238 : vector<8x128xf32>
    %cst_65 = arith.constant 1.000000e-03 : f32
    %246 = vector.broadcast %cst_65 : f32 to vector<8x128xf32>
    %247 = arith.addf %246, %245 : vector<8x128xf32>
    %248 = arith.mulf %132, %238 : vector<8x128xf32>
    %cst_66 = arith.constant 1.000000e-03 : f32
    %249 = vector.broadcast %cst_66 : f32 to vector<8x128xf32>
    %250 = arith.addf %249, %248 : vector<8x128xf32>
    %251 = arith.mulf %144, %238 : vector<8x128xf32>
    %cst_67 = arith.constant 1.000000e-03 : f32
    %252 = vector.broadcast %cst_67 : f32 to vector<8x128xf32>
    %253 = arith.addf %252, %251 : vector<8x128xf32>
    %254 = arith.mulf %156, %238 : vector<8x128xf32>
    %cst_68 = arith.constant 1.000000e-03 : f32
    %255 = vector.broadcast %cst_68 : f32 to vector<8x128xf32>
    %256 = arith.addf %255, %254 : vector<8x128xf32>
    %257 = arith.mulf %168, %238 : vector<8x128xf32>
    %cst_69 = arith.constant 1.000000e-03 : f32
    %258 = vector.broadcast %cst_69 : f32 to vector<8x128xf32>
    %259 = arith.addf %258, %257 : vector<8x128xf32>
    %260 = arith.mulf %180, %238 : vector<8x128xf32>
    %cst_70 = arith.constant 1.000000e-03 : f32
    %261 = vector.broadcast %cst_70 : f32 to vector<8x128xf32>
    %262 = arith.addf %261, %260 : vector<8x128xf32>
    %263 = arith.mulf %192, %238 : vector<8x128xf32>
    %cst_71 = arith.constant 1.000000e-03 : f32
    %264 = vector.broadcast %cst_71 : f32 to vector<8x128xf32>
    %265 = arith.addf %264, %263 : vector<8x128xf32>
    %cst_72 = arith.constant 0.000000e+00 : f32
    %266 = vector.broadcast %cst_72 : f32 to vector<8x128xf32>
    %267 = arith.addf %266, %63 : vector<8x128xf32>
    %268 = arith.cmpf oge, %0, %267 : vector<8x128xf32>
    %cst_73 = arith.constant dense<true> : vector<8x128xi1>
    %269 = arith.xori %268, %cst_73 : vector<8x128xi1>
    %270 = arith.select %269, %266, %266 : vector<8x128xi1>, vector<8x128xf32>
    %271 = arith.select %269, %63, %266 : vector<8x128xi1>, vector<8x128xf32>
    %272 = arith.select %269, %266, %266 : vector<8x128xi1>, vector<8x128xf32>
    %273 = arith.select %269, %241, %266 : vector<8x128xi1>, vector<8x128xf32>
    %274 = arith.select %269, %244, %266 : vector<8x128xi1>, vector<8x128xf32>
    %275 = arith.addf %241, %244 : vector<8x128xf32>
    %cst_74 = arith.constant 5.000000e-01 : f32
    %276 = vector.broadcast %cst_74 : f32 to vector<8x128xf32>
    %277 = arith.mulf %275, %276 : vector<8x128xf32>
    %278 = arith.mulf %277, %63 : vector<8x128xf32>
    %279 = arith.addf %266, %278 : vector<8x128xf32>
    %280 = arith.addf %267, %66 : vector<8x128xf32>
    %281 = arith.cmpf oge, %0, %280 : vector<8x128xf32>
    %cst_75 = arith.constant dense<true> : vector<8x128xi1>
    %282 = arith.xori %281, %cst_75 : vector<8x128xi1>
    %283 = arith.andi %268, %282 : vector<8x128xi1>
    %284 = arith.select %283, %267, %270 : vector<8x128xi1>, vector<8x128xf32>
    %285 = arith.select %283, %66, %271 : vector<8x128xi1>, vector<8x128xf32>
    %286 = arith.select %283, %279, %272 : vector<8x128xi1>, vector<8x128xf32>
    %287 = arith.select %283, %244, %273 : vector<8x128xi1>, vector<8x128xf32>
    %288 = arith.select %283, %247, %274 : vector<8x128xi1>, vector<8x128xf32>
    %289 = arith.addf %244, %247 : vector<8x128xf32>
    %cst_76 = arith.constant 5.000000e-01 : f32
    %290 = vector.broadcast %cst_76 : f32 to vector<8x128xf32>
    %291 = arith.mulf %289, %290 : vector<8x128xf32>
    %292 = arith.mulf %291, %66 : vector<8x128xf32>
    %293 = arith.addf %279, %292 : vector<8x128xf32>
    %294 = arith.addf %280, %69 : vector<8x128xf32>
    %295 = arith.cmpf oge, %0, %294 : vector<8x128xf32>
    %cst_77 = arith.constant dense<true> : vector<8x128xi1>
    %296 = arith.xori %295, %cst_77 : vector<8x128xi1>
    %297 = arith.andi %281, %296 : vector<8x128xi1>
    %298 = arith.select %297, %280, %284 : vector<8x128xi1>, vector<8x128xf32>
    %299 = arith.select %297, %69, %285 : vector<8x128xi1>, vector<8x128xf32>
    %300 = arith.select %297, %293, %286 : vector<8x128xi1>, vector<8x128xf32>
    %301 = arith.select %297, %247, %287 : vector<8x128xi1>, vector<8x128xf32>
    %302 = arith.select %297, %250, %288 : vector<8x128xi1>, vector<8x128xf32>
    %303 = arith.addf %247, %250 : vector<8x128xf32>
    %cst_78 = arith.constant 5.000000e-01 : f32
    %304 = vector.broadcast %cst_78 : f32 to vector<8x128xf32>
    %305 = arith.mulf %303, %304 : vector<8x128xf32>
    %306 = arith.mulf %305, %69 : vector<8x128xf32>
    %307 = arith.addf %293, %306 : vector<8x128xf32>
    %308 = arith.addf %294, %72 : vector<8x128xf32>
    %309 = arith.cmpf oge, %0, %308 : vector<8x128xf32>
    %cst_79 = arith.constant dense<true> : vector<8x128xi1>
    %310 = arith.xori %309, %cst_79 : vector<8x128xi1>
    %311 = arith.andi %295, %310 : vector<8x128xi1>
    %312 = arith.select %311, %294, %298 : vector<8x128xi1>, vector<8x128xf32>
    %313 = arith.select %311, %72, %299 : vector<8x128xi1>, vector<8x128xf32>
    %314 = arith.select %311, %307, %300 : vector<8x128xi1>, vector<8x128xf32>
    %315 = arith.select %311, %250, %301 : vector<8x128xi1>, vector<8x128xf32>
    %316 = arith.select %311, %253, %302 : vector<8x128xi1>, vector<8x128xf32>
    %317 = arith.addf %250, %253 : vector<8x128xf32>
    %cst_80 = arith.constant 5.000000e-01 : f32
    %318 = vector.broadcast %cst_80 : f32 to vector<8x128xf32>
    %319 = arith.mulf %317, %318 : vector<8x128xf32>
    %320 = arith.mulf %319, %72 : vector<8x128xf32>
    %321 = arith.addf %307, %320 : vector<8x128xf32>
    %322 = arith.addf %308, %75 : vector<8x128xf32>
    %323 = arith.cmpf oge, %0, %322 : vector<8x128xf32>
    %cst_81 = arith.constant dense<true> : vector<8x128xi1>
    %324 = arith.xori %323, %cst_81 : vector<8x128xi1>
    %325 = arith.andi %309, %324 : vector<8x128xi1>
    %326 = arith.select %325, %308, %312 : vector<8x128xi1>, vector<8x128xf32>
    %327 = arith.select %325, %75, %313 : vector<8x128xi1>, vector<8x128xf32>
    %328 = arith.select %325, %321, %314 : vector<8x128xi1>, vector<8x128xf32>
    %329 = arith.select %325, %253, %315 : vector<8x128xi1>, vector<8x128xf32>
    %330 = arith.select %325, %256, %316 : vector<8x128xi1>, vector<8x128xf32>
    %331 = arith.addf %253, %256 : vector<8x128xf32>
    %cst_82 = arith.constant 5.000000e-01 : f32
    %332 = vector.broadcast %cst_82 : f32 to vector<8x128xf32>
    %333 = arith.mulf %331, %332 : vector<8x128xf32>
    %334 = arith.mulf %333, %75 : vector<8x128xf32>
    %335 = arith.addf %321, %334 : vector<8x128xf32>
    %336 = arith.addf %322, %78 : vector<8x128xf32>
    %337 = arith.cmpf oge, %0, %336 : vector<8x128xf32>
    %cst_83 = arith.constant dense<true> : vector<8x128xi1>
    %338 = arith.xori %337, %cst_83 : vector<8x128xi1>
    %339 = arith.andi %323, %338 : vector<8x128xi1>
    %340 = arith.select %339, %322, %326 : vector<8x128xi1>, vector<8x128xf32>
    %341 = arith.select %339, %78, %327 : vector<8x128xi1>, vector<8x128xf32>
    %342 = arith.select %339, %335, %328 : vector<8x128xi1>, vector<8x128xf32>
    %343 = arith.select %339, %256, %329 : vector<8x128xi1>, vector<8x128xf32>
    %344 = arith.select %339, %259, %330 : vector<8x128xi1>, vector<8x128xf32>
    %345 = arith.addf %256, %259 : vector<8x128xf32>
    %cst_84 = arith.constant 5.000000e-01 : f32
    %346 = vector.broadcast %cst_84 : f32 to vector<8x128xf32>
    %347 = arith.mulf %345, %346 : vector<8x128xf32>
    %348 = arith.mulf %347, %78 : vector<8x128xf32>
    %349 = arith.addf %335, %348 : vector<8x128xf32>
    %350 = arith.addf %336, %81 : vector<8x128xf32>
    %351 = arith.cmpf oge, %0, %350 : vector<8x128xf32>
    %cst_85 = arith.constant dense<true> : vector<8x128xi1>
    %352 = arith.xori %351, %cst_85 : vector<8x128xi1>
    %353 = arith.andi %337, %352 : vector<8x128xi1>
    %354 = arith.select %353, %336, %340 : vector<8x128xi1>, vector<8x128xf32>
    %355 = arith.select %353, %81, %341 : vector<8x128xi1>, vector<8x128xf32>
    %356 = arith.select %353, %349, %342 : vector<8x128xi1>, vector<8x128xf32>
    %357 = arith.select %353, %259, %343 : vector<8x128xi1>, vector<8x128xf32>
    %358 = arith.select %353, %262, %344 : vector<8x128xi1>, vector<8x128xf32>
    %359 = arith.addf %259, %262 : vector<8x128xf32>
    %cst_86 = arith.constant 5.000000e-01 : f32
    %360 = vector.broadcast %cst_86 : f32 to vector<8x128xf32>
    %361 = arith.mulf %359, %360 : vector<8x128xf32>
    %362 = arith.mulf %361, %81 : vector<8x128xf32>
    %363 = arith.addf %349, %362 : vector<8x128xf32>
    %364 = arith.select %351, %350, %354 : vector<8x128xi1>, vector<8x128xf32>
    %365 = arith.select %351, %84, %355 : vector<8x128xi1>, vector<8x128xf32>
    %366 = arith.select %351, %363, %356 : vector<8x128xi1>, vector<8x128xf32>
    %367 = arith.select %351, %262, %357 : vector<8x128xi1>, vector<8x128xf32>
    %368 = arith.select %351, %265, %358 : vector<8x128xi1>, vector<8x128xf32>
    %369 = arith.subf %368, %367 : vector<8x128xf32>
    %cst_87 = arith.constant 5.000000e-01 : f32
    %370 = vector.broadcast %cst_87 : f32 to vector<8x128xf32>
    %371 = arith.mulf %370, %369 : vector<8x128xf32>
    %372 = arith.mulf %371, %365 : vector<8x128xf32>
    %373 = arith.mulf %367, %365 : vector<8x128xf32>
    %374 = arith.subf %0, %364 : vector<8x128xf32>
    %375 = tpu.reciprocal %365 {approx = true} : vector<8x128xf32> -> vector<8x128xf32>
    %376 = arith.mulf %365, %375 : vector<8x128xf32>
    %cst_88 = arith.constant 2.000000e+00 : f32
    %377 = vector.broadcast %cst_88 : f32 to vector<8x128xf32>
    %378 = arith.subf %377, %376 : vector<8x128xf32>
    %379 = arith.mulf %375, %378 : vector<8x128xf32>
    %380 = arith.mulf %374, %379 : vector<8x128xf32>
    %381 = arith.mulf %372, %380 : vector<8x128xf32>
    %382 = arith.mulf %381, %380 : vector<8x128xf32>
    %383 = arith.mulf %373, %380 : vector<8x128xf32>
    %384 = arith.addf %382, %383 : vector<8x128xf32>
    %385 = arith.addf %384, %366 : vector<8x128xf32>
    %cst_89 = arith.constant 0.000000e+00 : f32
    %cst_90 = arith.constant 1.000000e+00 : f32
    %386 = vector.broadcast %cst_89 : f32 to vector<8x128xf32>
    %387 = arith.maximumf %386, %385 : vector<8x128xf32>
    %388 = vector.broadcast %cst_90 : f32 to vector<8x128xf32>
    %389 = arith.minimumf %388, %387 : vector<8x128xf32>
    %390 = arith.subf %368, %367 : vector<8x128xf32>
    %391 = arith.mulf %380, %390 : vector<8x128xf32>
    %392 = arith.addf %391, %367 : vector<8x128xf32>
    %393 = math.log %392 : vector<8x128xf32>
    %c0_91 = arith.constant 0 : index
    %c0_92 = arith.constant 0 : index
    %394 = vector.load %arg5[%c0_91, %c0_92] : memref<8x128xf32, #tpu.memory_space<vmem>>, vector<8x128xf32>
    tpu.vector_store %arg5[%c0_91, %c0_92], %389 {strides = array<i32>} : memref<8x128xf32, #tpu.memory_space<vmem>>, vector<8x128xf32>,
    %cst_93 = arith.constant dense<0.000000e+00> : vector<128xf32>
    %395 = vector.multi_reduction <add>, %393, %cst_93 [0] : vector<8x128xf32> to vector<128xf32>
    %396 = vector.shape_cast %395 : vector<128xf32> to vector<1x128xf32>
    %c0_94 = arith.constant 0 : index
    %c0_95 = arith.constant 0 : index
    %397 = vector.load %arg6[%c0_94, %c0_95] : memref<1x128xf32, #tpu.memory_space<vmem>>, vector<1x128xf32>
    tpu.vector_store %arg6[%c0_94, %c0_95], %396 {strides = array<i32>} : memref<1x128xf32, #tpu.memory_space<vmem>>, vector<1x128xf32>,
    return
  }
  func.func @transform_0(%arg0: i32) -> (i32, i32) {
    %c0_i32 = arith.constant 0 : i32
    %c0_i32_0 = arith.constant 0 : i32
    return %c0_i32, %arg0 : i32, i32
  }
  func.func @transform_1(%arg0: i32) -> (i32, i32) {
    %c0_i32 = arith.constant 0 : i32
    %c0_i32_0 = arith.constant 0 : i32
    return %c0_i32, %arg0 : i32, i32
  }
  func.func @transform_2(%arg0: i32) -> (i32, i32) {
    %c0_i32 = arith.constant 0 : i32
    %c0_i32_0 = arith.constant 0 : i32
    %c0_i32_1 = arith.constant 0 : i32
    return %c0_i32, %c0_i32_0 : i32, i32
  }
  func.func @transform_3(%arg0: i32) -> (i32, i32) {
    %c0_i32 = arith.constant 0 : i32
    %c0_i32_0 = arith.constant 0 : i32
    %c0_i32_1 = arith.constant 0 : i32
    return %c0_i32, %c0_i32_0 : i32, i32
  }
  func.func @transform_4(%arg0: i32) -> (i32, i32) {
    %c0_i32 = arith.constant 0 : i32
    %c0_i32_0 = arith.constant 0 : i32
    return %c0_i32, %arg0 : i32, i32
  }
  func.func @transform_5(%arg0: i32) -> (i32, i32) {
    %c0_i32 = arith.constant 0 : i32
    %c0_i32_0 = arith.constant 0 : i32
    return %c0_i32, %arg0 : i32, i32
  }
}

</mosaic_0001>

<llo_original>
// kernel: tpu_custom_call.1
$region0: #{tpu_custom_call.1}
  #allocation0 [shape = 'u32[]', space=smem, size = 0x4, offset = 0x4, fixed_abs, tag = 'smem constant byte address 0x4 - core index']
  #allocation1 [shape = 'u32[144,128]{1,0:T(1,128)}', space=vmem, size = 0x12000, scoped, tag = 'internal scratch']
  %s0 = inlined_call_operand.vmem [shape: f32[8,256], index: 0, kind: input, shape index: {}]
  %s1 = inlined_call_operand.vmem [shape: f32[12,256], index: 1, kind: input, shape index: {}]
  %s2 = inlined_call_operand.vmem [shape: f32[136,12], index: 2, kind: input, shape index: {}]
  %s3 = inlined_call_operand.vmem [shape: f32[136,1], index: 3, kind: input, shape index: {}]
  %s4 = inlined_call_operand.hbm [shape: f32[8,256], index: 4, kind: output, shape index: {0}]
  %s5 = inlined_call_operand.hbm [shape: f32[1,256], index: 5, kind: output, shape index: {1}]
  %6 = xla_tuple %s4, %s5
  %s7 = sld [smem:[#allocation0]]
  $region95: #{tpu_custom_call.1} parent=0
    _
  %s9 = ssub.s32 1, %s7
  %s10 = scalar_select 0, %s9, %s7
  $region1: #{tpu_custom_call.1} parent=0
    #allocation2 [shape = 'u8[16384]{0}', space=vmem, size = 0x4000, scoped, tag = 'input window, operand 1']
    #allocation3 [shape = 'u8[8192]{0}', space=vmem, size = 0x2000, scoped, tag = 'output window, operand 0']
    #allocation4 [shape = 's32[2]{0}', space=sflag, size = 0x8, scoped, tag = 'scoped memory for tpu_custom_call.1']
    #allocation5 [shape = 'u8[1024]{0}', space=vmem, size = 0x400, scoped, tag = 'output window, operand 1']
    #allocation6 [shape = 's32[2]{0}', space=sflag, size = 0x8, scoped, tag = 'scoped memory for tpu_custom_call.1']
    %11 = vsyncpa [#allocation4], 0
    %s12 = scalar_lea.sflag [#allocation4], 1
    %13 = vsyncpa %s12, 0
    %14 = vsyncpa [#allocation6], 0
    %s15 = scalar_lea.sflag [#allocation6], 1
    %16 = vsyncpa %s15, 0
    loop: start=0, step=1, limit=4
    $region2: #{tpu_custom_call.1} parent=1 // loop_pre_header
      _
    $region3: #{tpu_custom_call.1} parent=1 // loop_header
      %s18 = sphi 0, %s22
      %p19 = scmp.ge.s32.totalorder %s18, 4
      %s28 = sphi 0, %s30
      %s31 = sphi 0, %s28
      %s32 = sphi 0, %s31
      %s48 = sphi 0, %s32
      %s54 = sphi 0, %s56
      %s57 = sphi 0, %s54
      %s58 = sphi 0, %s57
      %s74 = sphi 0, %s58
      %s78 = sphi 0, %s78
      %s80 = sphi 0, %s78
      %s81 = sphi 0, %s80
      %s95 = sphi 0, %s81
      %s99 = sphi 0, %s99
      %s101 = sphi 0, %s99
      %s102 = sphi 0, %s101
      %s116 = sphi 0, %s102
      %s122 = sphi 0, %s124
      %s125 = sphi 0, %s122
      %s126 = sphi 0, %s125
      %s142 = sphi 0, %s126
      %s148 = sphi 0, %s150
      %s151 = sphi 0, %s148
      %s152 = sphi 0, %s151
      %s168 = sphi 0, %s152
    $region4: #{tpu_custom_call.1} parent=1 // loop_header_branch
      %21 = sbr.rel (%p19) target = $region8
    $region5: #{tpu_custom_call.1} parent=1 // loop_body
      %s23 = ssub.s32 %s18, 1
      %s24 = ssub.s32 %s18, 2
      %s25 = sadd.s32 %s18, 1
      %s26 = ssub.s32 %s18, %s25
      %p27 = scmp.eq.s32.totalorder %s26, 0
      %s29 = sadd.s32 %s28, 1
      %s30 = scalar_select %p27, %s28, %s29
      %p33 = pneg %p27
      %p34 = scmp.eq.s32.totalorder %s18, 1
      %p35 = por %p33, %p34
      %p36 = scmp.ne.s32.totalorder %s28, %s31
      %p37 = scmp.eq.s32.totalorder %s18, 0
      %p38 = por %p36, %p37
      %p39 = scmp.ne.s32.totalorder %s28, %s31
      %p40 = scmp.eq.s32.totalorder %s23, 1
      %p41 = por %p39, %p40
      %p42 = scmp.ne.s32.totalorder %s31, %s32
      %p43 = scmp.eq.s32.totalorder %s23, 0
      %p44 = por %p42, %p43
      %p45 = scmp.ne.s32.totalorder %s31, %s32
      %p46 = scmp.eq.s32.totalorder %s24, 1
      %p47 = por %p45, %p46
      %p49 = scmp.ne.s32.totalorder %s32, %s48
      %p50 = scmp.eq.s32.totalorder %s24, 0
      %p51 = por %p49, %p50
      %s52 = ssub.s32 %s18, %s25
      %p53 = scmp.eq.s32.totalorder %s52, 0
      %s55 = sadd.s32 %s54, 1
      %s56 = scalar_select %p53, %s54, %s55
      %p59 = pneg %p53
      %p60 = scmp.eq.s32.totalorder %s18, 1
      %p61 = por %p59, %p60
      %p62 = scmp.ne.s32.totalorder %s54, %s57
      %p63 = scmp.eq.s32.totalorder %s18, 0
      %p64 = por %p62, %p63
      %p65 = scmp.ne.s32.totalorder %s54, %s57
      %p66 = scmp.eq.s32.totalorder %s23, 1
      %p67 = por %p65, %p66
      %p68 = scmp.ne.s32.totalorder %s57, %s58
      %p69 = scmp.eq.s32.totalorder %s23, 0
      %p70 = por %p68, %p69
      %p71 = scmp.ne.s32.totalorder %s57, %s58
      %p72 = scmp.eq.s32.totalorder %s24, 1
      %p73 = por %p71, %p72
      %p75 = scmp.ne.s32.totalorder %s58, %s74
      %p76 = scmp.eq.s32.totalorder %s24, 0
      %p77 = por %p75, %p76
      %s79 = sadd.s32 %s78, 1
      %p82 = scmp.eq.s32.totalorder %s18, 1
      %p83 = scmp.ne.s32.totalorder %s78, %s80
      %p84 = scmp.eq.s32.totalorder %s18, 0
      %p85 = por %p83, %p84
      %p86 = scmp.ne.s32.totalorder %s78, %s80
      %p87 = scmp.eq.s32.totalorder %s23, 1
      %p88 = por %p86, %p87
      %p89 = scmp.ne.s32.totalorder %s80, %s81
      %p90 = scmp.eq.s32.totalorder %s23, 0
      %p91 = por %p89, %p90
      %p92 = scmp.ne.s32.totalorder %s80, %s81
      %p93 = scmp.eq.s32.totalorder %s24, 1
      %p94 = por %p92, %p93
      %p96 = scmp.ne.s32.totalorder %s81, %s95
      %p97 = scmp.eq.s32.totalorder %s24, 0
      %p98 = por %p96, %p97
      %s100 = sadd.s32 %s99, 1
      %p103 = scmp.eq.s32.totalorder %s18, 1
      %p104 = scmp.ne.s32.totalorder %s99, %s101
      %p105 = scmp.eq.s32.totalorder %s18, 0
      %p106 = por %p104, %p105
      %p107 = scmp.ne.s32.totalorder %s99, %s101
      %p108 = scmp.eq.s32.totalorder %s23, 1
      %p109 = por %p107, %p108
      %p110 = scmp.ne.s32.totalorder %s101, %s102
      %p111 = scmp.eq.s32.totalorder %s23, 0
      %p112 = por %p110, %p111
      %p113 = scmp.ne.s32.totalorder %s101, %s102
      %p114 = scmp.eq.s32.totalorder %s24, 1
      %p115 = por %p113, %p114
      %p117 = scmp.ne.s32.totalorder %s102, %s116
      %p118 = scmp.eq.s32.totalorder %s24, 0
      %p119 = por %p117, %p118
      %s120 = ssub.s32 %s18, %s25
      %p121 = scmp.eq.s32.totalorder %s120, 0
      %s123 = sadd.s32 %s122, 1
      %s124 = scalar_select %p121, %s122, %s123
      %p127 = pneg %p121
      %p128 = scmp.eq.s32.totalorder %s18, 1
      %p129 = por %p127, %p128
      %p130 = scmp.ne.s32.totalorder %s122, %s125
      %p131 = scmp.eq.s32.totalorder %s18, 0
      %p132 = por %p130, %p131
      %p133 = scmp.ne.s32.totalorder %s122, %s125
      %p134 = scmp.eq.s32.totalorder %s23, 1
      %p135 = por %p133, %p134
      %p136 = scmp.ne.s32.totalorder %s125, %s126
      %p137 = scmp.eq.s32.totalorder %s23, 0
      %p138 = por %p136, %p137
      %p139 = scmp.ne.s32.totalorder %s125, %s126
      %p140 = scmp.eq.s32.totalorder %s24, 1
      %p141 = por %p139, %p140
      %p143 = scmp.ne.s32.totalorder %s126, %s142
      %p144 = scmp.eq.s32.totalorder %s24, 0
      %p145 = por %p143, %p144
      %s146 = ssub.s32 %s18, %s25
      %p147 = scmp.eq.s32.totalorder %s146, 0
      %s149 = sadd.s32 %s148, 1
      %s150 = scalar_select %p147, %s148, %s149
      %p153 = pneg %p147
      %p154 = scmp.eq.s32.totalorder %s18, 1
      %p155 = por %p153, %p154
      %p156 = scmp.ne.s32.totalorder %s148, %s151
      %p157 = scmp.eq.s32.totalorder %s18, 0
      %p158 = por %p156, %p157
      %p159 = scmp.ne.s32.totalorder %s148, %s151
      %p160 = scmp.eq.s32.totalorder %s23, 1
      %p161 = por %p159, %p160
      %p162 = scmp.ne.s32.totalorder %s151, %s152
      %p163 = scmp.eq.s32.totalorder %s23, 0
      %p164 = por %p162, %p163
      %p165 = scmp.ne.s32.totalorder %s151, %s152
      %p166 = scmp.eq.s32.totalorder %s24, 1
      %p167 = por %p165, %p166
      %p169 = scmp.ne.s32.totalorder %s152, %s168
      %p170 = scmp.eq.s32.totalorder %s24, 0
      %p171 = por %p169, %p170
      %p172 = scmp.le.s32.totalorder 1, %s18
      %p173 = scmp.lt.s32.totalorder %s18, 3
      %p174 = pnand %p172, %p173
      %p175 = pneg %p174
      // Predicated region
      $region9: #{tpu_custom_call.1} parent=5 // pred_check
        _
      $region10: #{tpu_custom_call.1} parent=5 // pred_check_branch
        %177 = sbr.rel (%p174) target = $region12
      $region11: #{tpu_custom_call.1} parent=5 // pred_region
        %s178 = ssub.s32 %s18, 1
        // Predicated region
        $region13: #{tpu_custom_call.1} parent=11 // pred_check
          %p179 = pneg %p91
        $region14: #{tpu_custom_call.1} parent=11 // pred_check_branch
          %181 = sbr.rel (%p179) target = $region16
        $region15: #{tpu_custom_call.1} parent=11 // pred_region
          _
        $region16: #{tpu_custom_call.1} parent=11 // pred_fallthru
          _
        // Predicated region
        $region17: #{tpu_custom_call.1} parent=11 // pred_check
          %p182 = pneg %p112
        $region18: #{tpu_custom_call.1} parent=11 // pred_check_branch
          %184 = sbr.rel (%p182) target = $region20
        $region19: #{tpu_custom_call.1} parent=11 // pred_region
          _
        $region20: #{tpu_custom_call.1} parent=11 // pred_fallthru
          _
      $region12: #{tpu_custom_call.1} parent=5 // pred_fallthru
        _
      %p185 = scmp.lt.s32.totalorder %s18, 2
      // Predicated region
      $region21: #{tpu_custom_call.1} parent=5 // pred_check
        %p186 = pneg %p185
      $region22: #{tpu_custom_call.1} parent=5 // pred_check_branch
        %188 = sbr.rel (%p186) target = $region24
      $region23: #{tpu_custom_call.1} parent=5 // pred_region
        // Predicated region
        $region25: #{tpu_custom_call.1} parent=23 // pred_check
          %p189 = pneg %p38
        $region26: #{tpu_custom_call.1} parent=23 // pred_check_branch
          %191 = sbr.rel (%p189) target = $region28
        $region27: #{tpu_custom_call.1} parent=23 // pred_region
          %p192 = scmp.lt.s32.totalorder %s18, 1
          %s193 = scalar_select %p192, %s18, 1
          %s194 = smul.addr %s193, 8
          %s195 = scalar_lea.vmem %s0, %s194
        $region28: #{tpu_custom_call.1} parent=23 // pred_fallthru
          _
        // Predicated region
        $region29: #{tpu_custom_call.1} parent=23 // pred_check
          %p196 = pneg %p64
        $region30: #{tpu_custom_call.1} parent=23 // pred_check_branch
          %198 = sbr.rel (%p196) target = $region32
        $region31: #{tpu_custom_call.1} parent=23 // pred_region
          %s199 = sand.u32 %s54, 1
          %s200 = sand.u32 %s54, 1
          %s201 = smul.addr %s200, 16
          %s202 = scalar_lea.vmem [#allocation2], %s201
          %s203 = smul.addr %s18, 8
          %s204 = scalar_lea.vmem %s1, %s203
          // Predicated region
          $region33: #{tpu_custom_call.1} parent=31 // pred_check
            _
          $region34: #{tpu_custom_call.1} parent=31 // pred_check_branch
            %206 = sbr.rel (0) target = $region36
          $region35: #{tpu_custom_call.1} parent=31 // pred_region
            // Predicated region
            $region37: #{tpu_custom_call.1} parent=35 // pred_check
              _
            $region38: #{tpu_custom_call.1} parent=35 // pred_check_branch
              %208 = sbr.rel (0) target = $region40
            $region39: #{tpu_custom_call.1} parent=35 // pred_region
              // Predicated region
              $region52: #{tpu_custom_call.1} parent=39 // pred_check
                _
              $region53: #{tpu_custom_call.1} parent=39 // pred_check_branch
                %226 = sbr.rel (0) target = $region55
              $region54: #{tpu_custom_call.1} parent=39 // pred_region
                loop: start=0, step=1, limit=1
                $region56: #{tpu_custom_call.1} parent=54 // loop_pre_header
                  _
                $region57: #{tpu_custom_call.1} parent=54 // loop_header
                  %s228 = sphi 0, %s232
                  %p229 = scmp.ge.s32.totalorder %s228, 1
                  %s233 = sphi %s204, %s204
                  %s234 = sphi %s202, %s202
                $region58: #{tpu_custom_call.1} parent=54 // loop_header_branch
                  %231 = sbr.rel (%p229) target = $region62
                $region59: #{tpu_custom_call.1} parent=54 // loop_body
                  %v235 = vld [vmem:[%s233] sm:$0xff]
                  %236 = vst [vmem:[%s234] sm:$0xff] %v235
                  %v237 = vld [vmem:[%s233 + $0x10] sm:$0xff]
                  %238 = vst [vmem:[%s234 + $0x8] sm:$0xff] %v237
                $region60: #{tpu_custom_call.1} parent=54 // loop_footer
                  %s232 = sadd.s32 1, %s228
                $region61: #{tpu_custom_call.1} parent=54 // loop_footer_branch
                  %227 = sbr.rel target = $region57
                $region62: #{tpu_custom_call.1} parent=54 // loop_exit
                  _
              $region55: #{tpu_custom_call.1} parent=39 // pred_fallthru
                _
              // Predicated region
              $region63: #{tpu_custom_call.1} parent=39 // pred_check
                _
              $region64: #{tpu_custom_call.1} parent=39 // pred_check_branch
                %240 = sbr.rel target = $region66
              $region65: #{tpu_custom_call.1} parent=39 // pred_region
                _
              $region66: #{tpu_custom_call.1} parent=39 // pred_fallthru
                _
            $region40: #{tpu_custom_call.1} parent=35 // pred_fallthru
              _
            // Predicated region
            $region41: #{tpu_custom_call.1} parent=35 // pred_check
              _
            $region42: #{tpu_custom_call.1} parent=35 // pred_check_branch
              %210 = sbr.rel target = $region44
            $region43: #{tpu_custom_call.1} parent=35 // pred_region
              %s212 = ssub.s32 256, 1
              loop: start=0, step=1, limit=1
              $region45: #{tpu_custom_call.1} parent=43 // loop_pre_header
                _
              $region46: #{tpu_custom_call.1} parent=43 // loop_header
                %s214 = sphi 0, %s218
                %p215 = scmp.ge.s32.totalorder %s214, 1
                %s219 = sphi %s204, %s204
                %s220 = sphi %s202, %s202
              $region47: #{tpu_custom_call.1} parent=43 // loop_header_branch
                %217 = sbr.rel (%p215) target = $region51
              $region48: #{tpu_custom_call.1} parent=43 // loop_body
                %v221 = vld [vmem:[%s219] sm:%s212]
                %222 = vst [vmem:[%s220] sm:%s212] %v221
                %v223 = vld [vmem:[%s219 + $0x10] sm:%s212]
                %224 = vst [vmem:[%s220 + $0x8] sm:%s212] %v223
              $region49: #{tpu_custom_call.1} parent=43 // loop_footer
                %s218 = sadd.s32 1, %s214
              $region50: #{tpu_custom_call.1} parent=43 // loop_footer_branch
                %213 = sbr.rel target = $region46
              $region51: #{tpu_custom_call.1} parent=43 // loop_exit
                _
            $region44: #{tpu_custom_call.1} parent=35 // pred_fallthru
              _
          $region36: #{tpu_custom_call.1} parent=31 // pred_fallthru
            _
          %241 = vnop
        $region32: #{tpu_custom_call.1} parent=23 // pred_fallthru
          _
      $region24: #{tpu_custom_call.1} parent=5 // pred_fallthru
        _
      %p242 = scmp.le.s32.totalorder 1, %s18
      %p243 = scmp.lt.s32.totalorder %s18, 3
      %p244 = pnand %p242, %p243
      %p245 = pneg %p244
      // Predicated region
      $region67: #{tpu_custom_call.1} parent=5 // pred_check
        _
      $region68: #{tpu_custom_call.1} parent=5 // pred_check_branch
        %247 = sbr.rel (%p244) target = $region70
      $region69: #{tpu_custom_call.1} parent=5 // pred_region
        %s248 = ssub.s32 %s18, 1
        %s249 = sand.u32 %s57, 1
        %s250 = sand.u32 %s57, 1
        %s251 = smul.addr %s250, 16
        %s252 = scalar_lea.vmem [#allocation2], %s251
        // Predicated region
        $region71: #{tpu_custom_call.1} parent=69 // pred_check
          %p253 = pneg %p70
        $region72: #{tpu_custom_call.1} parent=69 // pred_check_branch
          %255 = sbr.rel (%p253) target = $region74
        $region73: #{tpu_custom_call.1} parent=69 // pred_region
          _
        $region74: #{tpu_custom_call.1} parent=69 // pred_fallthru
          _
        %p256 = scmp.lt.s32.totalorder %s23, 1
        %s257 = scalar_select %p256, %s23, 1
        %s258 = smul.addr %s257, 8
        %s259 = scalar_lea.vmem %s0, %s258
        %p260 = pneg %p44
        %p261 = pneg %p41
        %s262 = sand.u32 %s57, 1
        %s263 = sand.u32 %s57, 1
        %s264 = smul.addr %s263, 16
        %s265 = scalar_lea.vmem [#allocation2], %s264
        %p266 = pneg %p70
        %p267 = pneg %p67
        %p268 = pneg %p91
        %p269 = pneg %p88
        %p270 = pneg %p112
        %p271 = pneg %p109
        %p272 = pneg %p138
        %p273 = pneg %p135
        %s274 = sand.u32 %s125, 1
        %s275 = scalar_lea.sflag [#allocation4], %s274
        %s276 = sand.u32 %s125, 1
        %s277 = smul.addr %s276, 8
        %s278 = scalar_lea.vmem [#allocation3], %s277
        %p279 = pneg %p164
        %p280 = pneg %p161
        %s281 = sand.u32 %s151, 1
        %s282 = scalar_lea.sflag [#allocation6], %s281
        %s283 = sand.u32 %s151, 1
        %s284 = scalar_lea.vmem [#allocation5], %s283
        %p285 = scmp.lt.s32.totalorder %s23, 1
        %s286 = scalar_select %p285, %s23, 1
        %s287 = smul.addr %s286, 8
        %s288 = scalar_lea.vmem %s0, %s287
        %v289 = vld [vmem:[%s288] sm:$0xff]
        %v290 = vld [vmem:[%s2] sm:$0xff]
        %v291 = vld [vmem:[%s2 + $0x8] sm:$0xff]
        %v292 = vld [vmem:[%s2 + $0x10] sm:$0xff]
        %v293 = vld [vmem:[%s2 + $0x18] sm:$0xff]
        %v294 = vld [vmem:[%s2 + $0x20] sm:$0xff]
        %v295 = vld [vmem:[%s2 + $0x28] sm:$0xff]
        %v296 = vld [vmem:[%s2 + $0x30] sm:$0xff]
        %v297 = vld [vmem:[%s2 + $0x38] sm:$0xff]
        %v298 = vld [vmem:[%s2 + $0x40] sm:$0xff]
        %v299 = vld [vmem:[%s2 + $0x48] sm:$0xff]
        %v300 = vld [vmem:[%s2 + $0x50] sm:$0xff]
        %v301 = vld [vmem:[%s2 + $0x58] sm:$0xff]
        %v302 = vld [vmem:[%s2 + $0x60] sm:$0xff]
        %v303 = vld [vmem:[%s2 + $0x68] sm:$0xff]
        %v304 = vld [vmem:[%s2 + $0x70] sm:$0xff]
        %v305 = vld [vmem:[%s2 + $0x78] sm:$0xff]
        %v306 = vld [vmem:[%s2 + $0x80] sm:$0xff]
        %v307 = vld [vmem:[%s252] sm:$0xff]
        %v308 = vld [vmem:[%s252 + $0x8] sm:$0xf]
        %v309 = vld [vmem:[%s3] sm:$0xff]
        %v310 = vld [vmem:[%s3 + $0x8] sm:$0xff]
        %v311 = vld [vmem:[%s3 + $0x10] sm:$0xff]
        %v312 = vld [vmem:[%s3 + $0x18] sm:$0xff]
        %v313 = vld [vmem:[%s3 + $0x20] sm:$0xff]
        %v314 = vld [vmem:[%s3 + $0x28] sm:$0xff]
        %v315 = vld [vmem:[%s3 + $0x30] sm:$0xff]
        %v316 = vld [vmem:[%s3 + $0x38] sm:$0xff]
        %v317 = vld [vmem:[%s3 + $0x40] sm:$0xff]
        %v318 = vld [vmem:[%s3 + $0x48] sm:$0xff]
        %v319 = vld [vmem:[%s3 + $0x50] sm:$0xff]
        %v320 = vld [vmem:[%s3 + $0x58] sm:$0xff]
        %v321 = vld [vmem:[%s3 + $0x60] sm:$0xff]
        %v322 = vld [vmem:[%s3 + $0x68] sm:$0xff]
        %v323 = vld [vmem:[%s3 + $0x70] sm:$0xff]
        %v324 = vld [vmem:[%s3 + $0x78] sm:$0xff]
        %v325 = vld [vmem:[%s3 + $0x80] sm:$0xff]
        %327 = vset.pattern.permute.xlu0 0
        %328 = vperm.xlu0 %327, %v309
        %v329 = vpop.permute.xlu0 %328
        %332 = vset.pattern.permute.xlu0 0
        %333 = vperm.xlu0 %332, %v310
        %v334 = vpop.permute.xlu0 %333
        %337 = vset.pattern.permute.xlu0 0
        %338 = vperm.xlu0 %337, %v311
        %v339 = vpop.permute.xlu0 %338
        %342 = vset.pattern.permute.xlu0 0
        %343 = vperm.xlu0 %342, %v312
        %v344 = vpop.permute.xlu0 %343
        %347 = vset.pattern.permute.xlu0 0
        %348 = vperm.xlu0 %347, %v313
        %v349 = vpop.permute.xlu0 %348
        %352 = vset.pattern.permute.xlu0 0
        %353 = vperm.xlu0 %352, %v314
        %v354 = vpop.permute.xlu0 %353
        %357 = vset.pattern.permute.xlu0 0
        %358 = vperm.xlu0 %357, %v315
        %v359 = vpop.permute.xlu0 %358
        %362 = vset.pattern.permute.xlu0 0
        %363 = vperm.xlu0 %362, %v316
        %v364 = vpop.permute.xlu0 %363
        %367 = vset.pattern.permute.xlu0 0
        %368 = vperm.xlu0 %367, %v317
        %v369 = vpop.permute.xlu0 %368
        %372 = vset.pattern.permute.xlu0 0
        %373 = vperm.xlu0 %372, %v318
        %v374 = vpop.permute.xlu0 %373
        %377 = vset.pattern.permute.xlu0 0
        %378 = vperm.xlu0 %377, %v319
        %v379 = vpop.permute.xlu0 %378
        %382 = vset.pattern.permute.xlu0 0
        %383 = vperm.xlu0 %382, %v320
        %v384 = vpop.permute.xlu0 %383
        %387 = vset.pattern.permute.xlu0 0
        %388 = vperm.xlu0 %387, %v321
        %v389 = vpop.permute.xlu0 %388
        %392 = vset.pattern.permute.xlu0 0
        %393 = vperm.xlu0 %392, %v322
        %v394 = vpop.permute.xlu0 %393
        %397 = vset.pattern.permute.xlu0 0
        %398 = vperm.xlu0 %397, %v323
        %v399 = vpop.permute.xlu0 %398
        %402 = vset.pattern.permute.xlu0 0
        %403 = vperm.xlu0 %402, %v324
        %v404 = vpop.permute.xlu0 %403
        %407 = vset.pattern.permute.xlu0 0
        %408 = vperm.xlu0 %407, %v325
        %v409 = vpop.permute.xlu0 %408
        %vm411 = vcmask 97280
        %v413 = vsel %vm411, %v290, 0
        %v416 = vsel %vm411, %v291, 0
        %v419 = vsel %vm411, %v292, 0
        %v422 = vsel %vm411, %v293, 0
        %v425 = vsel %vm411, %v294, 0
        %v428 = vsel %vm411, %v295, 0
        %v431 = vsel %vm411, %v296, 0
        %v434 = vsel %vm411, %v297, 0
        %v437 = vsel %vm411, %v298, 0
        %v440 = vsel %vm411, %v299, 0
        %v443 = vsel %vm411, %v300, 0
        %v446 = vsel %vm411, %v301, 0
        %v449 = vsel %vm411, %v302, 0
        %v452 = vsel %vm411, %v303, 0
        %v455 = vsel %vm411, %v304, 0
        %v458 = vsel %vm411, %v305, 0
        %v461 = vsel %vm411, %v306, 0
        %vm463 = vcmask 1043456
        %v465 = vsel %vm463, %v308, 0
        %467 = vmatprep.subr.mxu0 0.0
        %468 = vmatpush1.msra.mxu0 0.0
        %469 = vmatprep.subr.mxu0 0.0
        %470 = vmatpush1.msra.mxu0 0.0
        %471 = vmatprep.subr.mxu0 0.0
        %472 = vmatpush1.msra.mxu0 0.0
        %473 = vmatprep.subr.mxu0 0.0
        %474 = vmatpush1.msra.mxu0 0.0
        %475 = vmatprep.subr.mxu0 0.0
        %476 = vmatpush1.msra.mxu0 0.0
        %477 = vmatprep.subr.mxu0 0.0
        %478 = vmatpush1.msra.mxu0 0.0
        %479 = vmatprep.subr.mxu0 0.0
        %480 = vmatpush1.msra.mxu0 0.0
        %481 = vmatprep.subr.mxu0 0.0
        %482 = vmatpush1.msra.mxu0 0.0
        %483 = vmatprep.subr.mxu0 0.0
        %484 = vmatpush1.msra.mxu0 0.0
        %485 = vmatprep.subr.mxu0 0.0
        %486 = vmatpush1.msra.mxu0 0.0
        %487 = vmatprep.subr.mxu0 0.0
        %488 = vmatpush1.msra.mxu0 0.0
        %489 = vmatprep.subr.mxu0 0.0
        %490 = vmatpush1.msra.mxu0 0.0
        %491 = vmatprep.subr.mxu0 0.0
        %492 = vmatpush1.msra.mxu0 0.0
        %493 = vmatprep.subr.mxu0 0.0
        %494 = vmatpush1.msra.mxu0 0.0
        %495 = vmatprep.subr.mxu0 0.0
        %496 = vmatpush1.msra.mxu0 %v465
        %497 = vmatprep.subr.mxu0 0.0
        %498 = vmatpush1.msra.mxu0 %v307
        %499 = vmatprep.subr.mxu0 0.0
        %500 = vmatpush2.msra.mxu0 0.0
        %501 = vmatprep.subr.mxu0 0.0
        %502 = vmatpush2.msra.mxu0 0.0
        %503 = vmatprep.subr.mxu0 0.0
        %504 = vmatpush2.msra.mxu0 0.0
        %505 = vmatprep.subr.mxu0 0.0
        %506 = vmatpush2.msra.mxu0 0.0
        %507 = vmatprep.subr.mxu0 0.0
        %508 = vmatpush2.msra.mxu0 0.0
        %509 = vmatprep.subr.mxu0 0.0
        %510 = vmatpush2.msra.mxu0 0.0
        %511 = vmatprep.subr.mxu0 0.0
        %512 = vmatpush2.msra.mxu0 0.0
        %513 = vmatprep.subr.mxu0 0.0
        %514 = vmatpush2.msra.mxu0 0.0
        %515 = vmatprep.subr.mxu0 0.0
        %516 = vmatpush2.msra.mxu0 0.0
        %517 = vmatprep.subr.mxu0 0.0
        %518 = vmatpush2.msra.mxu0 0.0
        %519 = vmatprep.subr.mxu0 0.0
        %520 = vmatpush2.msra.mxu0 0.0
        %521 = vmatprep.subr.mxu0 0.0
        %522 = vmatpush2.msra.mxu0 0.0
        %523 = vmatprep.subr.mxu0 0.0
        %524 = vmatpush2.msra.mxu0 0.0
        %525 = vmatprep.subr.mxu0 0.0
        %526 = vmatpush2.msra.mxu0 0.0
        %527 = vmatprep.subr.mxu0 0.0
        %528 = vmatpush2.msra.mxu0 0.0
        %529 = vmatprep.subr.mxu0 0.0
        %530 = vmatpush2.msra.mxu0 0.0
        %531 = vmatprep.mubr.f32.mxu0 0.0
        %532 = vmatmul.mubr.f32.gmra.mxu0 %v413
        %v533 = vpop.f32.mrf.mxu0
        %v534 = vadd.f32 %v329, %v533
        %v535 = vpop.f32.mrf.mxu0
        %536 = vmatprep.mubr.f32.mxu0 0.0
        %537 = vmatmul.mubr.f32.gmra.mxu0 %v416
        %v538 = vpop.f32.mrf.mxu0
        %v539 = vadd.f32 %v334, %v538
        %v540 = vpop.f32.mrf.mxu0
        %541 = vmatprep.mubr.f32.mxu0 0.0
        %542 = vmatmul.mubr.f32.gmra.mxu0 %v419
        %v543 = vpop.f32.mrf.mxu0
        %v544 = vadd.f32 %v339, %v543
        %v545 = vpop.f32.mrf.mxu0
        %546 = vmatprep.mubr.f32.mxu0 0.0
        %547 = vmatmul.mubr.f32.gmra.mxu0 %v422
        %v548 = vpop.f32.mrf.mxu0
        %v549 = vadd.f32 %v344, %v548
        %v550 = vpop.f32.mrf.mxu0
        %551 = vmatprep.mubr.f32.mxu0 0.0
        %552 = vmatmul.mubr.f32.gmra.mxu0 %v425
        %v553 = vpop.f32.mrf.mxu0
        %v554 = vadd.f32 %v349, %v553
        %v555 = vpop.f32.mrf.mxu0
        %556 = vmatprep.mubr.f32.mxu0 0.0
        %557 = vmatmul.mubr.f32.gmra.mxu0 %v428
        %v558 = vpop.f32.mrf.mxu0
        %v559 = vadd.f32 %v354, %v558
        %v560 = vpop.f32.mrf.mxu0
        %561 = vmatprep.mubr.f32.mxu0 0.0
        %562 = vmatmul.mubr.f32.gmra.mxu0 %v431
        %v563 = vpop.f32.mrf.mxu0
        %v564 = vadd.f32 %v359, %v563
        %v565 = vpop.f32.mrf.mxu0
        %566 = vmatprep.mubr.f32.mxu0 0.0
        %567 = vmatmul.mubr.f32.gmra.mxu0 %v434
        %v568 = vpop.f32.mrf.mxu0
        %v569 = vadd.f32 %v364, %v568
        %v570 = vpop.f32.mrf.mxu0
        %571 = vmatprep.mubr.f32.mxu0 0.0
        %572 = vmatmul.mubr.f32.gmra.mxu0 %v437
        %v573 = vpop.f32.mrf.mxu0
        %v574 = vadd.f32 %v369, %v573
        %v575 = vpop.f32.mrf.mxu0
        %576 = vmatprep.mubr.f32.mxu0 0.0
        %577 = vmatmul.mubr.f32.gmra.mxu0 %v440
        %v578 = vpop.f32.mrf.mxu0
        %v579 = vadd.f32 %v374, %v578
        %v580 = vpop.f32.mrf.mxu0
        %581 = vmatprep.mubr.f32.mxu0 0.0
        %582 = vmatmul.mubr.f32.gmra.mxu0 %v443
        %v583 = vpop.f32.mrf.mxu0
        %v584 = vadd.f32 %v379, %v583
        %v585 = vpop.f32.mrf.mxu0
        %586 = vmatprep.mubr.f32.mxu0 0.0
        %587 = vmatmul.mubr.f32.gmra.mxu0 %v446
        %v588 = vpop.f32.mrf.mxu0
        %v589 = vadd.f32 %v384, %v588
        %v590 = vpop.f32.mrf.mxu0
        %591 = vmatprep.mubr.f32.mxu0 0.0
        %592 = vmatmul.mubr.f32.gmra.mxu0 %v449
        %v593 = vpop.f32.mrf.mxu0
        %v594 = vadd.f32 %v389, %v593
        %v595 = vpop.f32.mrf.mxu0
        %596 = vmatprep.mubr.f32.mxu0 0.0
        %597 = vmatmul.mubr.f32.gmra.mxu0 %v452
        %v598 = vpop.f32.mrf.mxu0
        %v599 = vadd.f32 %v394, %v598
        %v600 = vpop.f32.mrf.mxu0
        %601 = vmatprep.mubr.f32.mxu0 0.0
        %602 = vmatmul.mubr.f32.gmra.mxu0 %v455
        %v603 = vpop.f32.mrf.mxu0
        %v604 = vadd.f32 %v399, %v603
        %v605 = vpop.f32.mrf.mxu0
        %606 = vmatprep.mubr.f32.mxu0 0.0
        %607 = vmatmul.mubr.f32.gmra.mxu0 %v458
        %v608 = vpop.f32.mrf.mxu0
        %v609 = vadd.f32 %v404, %v608
        %v610 = vpop.f32.mrf.mxu0
        %611 = vmatprep.mubr.f32.mxu0 0.0
        %612 = vmatmul.mubr.f32.gmra.mxu0 %v461
        %v613 = vpop.f32.mrf.mxu0
        %v614 = vadd.f32 %v409, %v613
        %v615 = vpop.f32.mrf.mxu0
        %616 = vdwg.mxu0
        %v617 = vmax.f32 %v579, %v584
        %v618 = vmax.f32 %v617, %v589
        %v619 = vmax.f32 %v618, %v594
        %v620 = vmax.f32 %v619, %v599
        %v621 = vmax.f32 %v620, %v604
        %v622 = vmax.f32 %v621, %v609
        %v623 = vmax.f32 %v622, %v614
        %v624 = vsub.f32 %v579, %v623
        %v625 = vmul.f32 %v624, 1.442695
        %v626 = vpow.pop %v625
        %v627 = vsub.f32 %v584, %v623
        %v628 = vmul.f32 %v627, 1.442695
        %v629 = vpow.pop %v628
        %v630 = vsub.f32 %v589, %v623
        %v631 = vmul.f32 %v630, 1.442695
        %v632 = vpow.pop %v631
        %v633 = vsub.f32 %v594, %v623
        %v634 = vmul.f32 %v633, 1.442695
        %v635 = vpow.pop %v634
        %v636 = vsub.f32 %v599, %v623
        %v637 = vmul.f32 %v636, 1.442695
        %v638 = vpow.pop %v637
        %v639 = vsub.f32 %v604, %v623
        %v640 = vmul.f32 %v639, 1.442695
        %v641 = vpow.pop %v640
        %v642 = vsub.f32 %v609, %v623
        %v643 = vmul.f32 %v642, 1.442695
        %v644 = vpow.pop %v643
        %v645 = vsub.f32 %v614, %v623
        %v646 = vmul.f32 %v645, 1.442695
        %v647 = vpow.pop %v646
        %v648 = vadd.f32 %v626, %v629
        %v649 = vadd.f32 %v648, %v632
        %v650 = vadd.f32 %v649, %v635
        %v651 = vadd.f32 %v650, %v638
        %v652 = vadd.f32 %v651, %v641
        %v653 = vadd.f32 %v652, %v644
        %v654 = vadd.f32 %v653, %v647
        %v655 = vrcp.pop %v654
        %v656 = vmul.f32 %v654, %v655
        %v657 = vsub.f32 2.0, %v656
        %v658 = vmul.f32 %v655, %v657
        %v659 = vmul.f32 %v658, 0.992
        %v660 = vmul.f32 %v626, %v659
        %v661 = vadd.f32 %v660, 0.001
        %v662 = vmul.f32 %v629, %v659
        %v663 = vadd.f32 %v662, 0.001
        %v664 = vmul.f32 %v632, %v659
        %v665 = vadd.f32 %v664, 0.001
        %v666 = vmul.f32 %v635, %v659
        %v667 = vadd.f32 %v666, 0.001
        %v668 = vmul.f32 %v638, %v659
        %v669 = vadd.f32 %v668, 0.001
        %v670 = vmul.f32 %v641, %v659
        %v671 = vadd.f32 %v670, 0.001
        %v672 = vmul.f32 %v644, %v659
        %v673 = vadd.f32 %v672, 0.001
        %v674 = vmul.f32 %v647, %v659
        %v675 = vadd.f32 %v674, 0.001
        %v676 = vmax.f32 %v534, 0.0
        %v677 = vand.u32 2147483647, %v534
        %v678 = vsub.f32 0.0, %v677
        %v679 = vmul.f32 %v678, 1.442695
        %v680 = vpow.pop %v679
        %v681 = vadd.f32 %v680, 1.0
        %v682 = vlog2.pop %v681
        %v683 = vmul.f32 %v682, 0.6931472
        %v684 = vadd.f32 %v676, %v683
        %v685 = vadd.f32 %v684, 0.001
        %v686 = vmax.f32 %v539, 0.0
        %v687 = vand.u32 2147483647, %v539
        %v688 = vsub.f32 0.0, %v687
        %v689 = vmul.f32 %v688, 1.442695
        %v690 = vpow.pop %v689
        %v691 = vadd.f32 %v690, 1.0
        %v692 = vlog2.pop %v691
        %v693 = vmul.f32 %v692, 0.6931472
        %v694 = vadd.f32 %v686, %v693
        %v695 = vadd.f32 %v694, 0.001
        %v696 = vmax.f32 %v544, 0.0
        %v697 = vand.u32 2147483647, %v544
        %v698 = vsub.f32 0.0, %v697
        %v699 = vmul.f32 %v698, 1.442695
        %v700 = vpow.pop %v699
        %v701 = vadd.f32 %v700, 1.0
        %v702 = vlog2.pop %v701
        %v703 = vmul.f32 %v702, 0.6931472
        %v704 = vadd.f32 %v696, %v703
        %v705 = vadd.f32 %v704, 0.001
        %v706 = vmax.f32 %v549, 0.0
        %v707 = vand.u32 2147483647, %v549
        %v708 = vsub.f32 0.0, %v707
        %v709 = vmul.f32 %v708, 1.442695
        %v710 = vpow.pop %v709
        %v711 = vadd.f32 %v710, 1.0
        %v712 = vlog2.pop %v711
        %v713 = vmul.f32 %v712, 0.6931472
        %v714 = vadd.f32 %v706, %v713
        %v715 = vadd.f32 %v714, 0.001
        %v716 = vmax.f32 %v554, 0.0
        %v717 = vand.u32 2147483647, %v554
        %v718 = vsub.f32 0.0, %v717
        %v719 = vmul.f32 %v718, 1.442695
        %v720 = vpow.pop %v719
        %v721 = vadd.f32 %v720, 1.0
        %v722 = vlog2.pop %v721
        %v723 = vmul.f32 %v722, 0.6931472
        %v724 = vadd.f32 %v716, %v723
        %v725 = vadd.f32 %v724, 0.001
        %v726 = vmax.f32 %v559, 0.0
        %v727 = vand.u32 2147483647, %v559
        %v728 = vsub.f32 0.0, %v727
        %v729 = vmul.f32 %v728, 1.442695
        %v730 = vpow.pop %v729
        %v731 = vadd.f32 %v730, 1.0
        %v732 = vlog2.pop %v731
        %v733 = vmul.f32 %v732, 0.6931472
        %v734 = vadd.f32 %v726, %v733
        %v735 = vadd.f32 %v734, 0.001
        %v736 = vmax.f32 %v564, 0.0
        %v737 = vand.u32 2147483647, %v564
        %v738 = vsub.f32 0.0, %v737
        %v739 = vmul.f32 %v738, 1.442695
        %v740 = vpow.pop %v739
        %v741 = vadd.f32 %v740, 1.0
        %v742 = vlog2.pop %v741
        %v743 = vmul.f32 %v742, 0.6931472
        %v744 = vadd.f32 %v736, %v743
        %v745 = vadd.f32 %v744, 0.001
        %v746 = vmax.f32 %v569, 0.0
        %v747 = vand.u32 2147483647, %v569
        %v748 = vsub.f32 0.0, %v747
        %v749 = vmul.f32 %v748, 1.442695
        %v750 = vpow.pop %v749
        %v751 = vadd.f32 %v750, 1.0
        %v752 = vlog2.pop %v751
        %v753 = vmul.f32 %v752, 0.6931472
        %v754 = vadd.f32 %v746, %v753
        %v755 = vadd.f32 %v754, 0.001
        %v756 = vmax.f32 %v574, 0.0
        %v757 = vand.u32 2147483647, %v574
        %v758 = vsub.f32 0.0, %v757
        %v759 = vmul.f32 %v758, 1.442695
        %v760 = vpow.pop %v759
        %v761 = vadd.f32 %v760, 1.0
        %v762 = vlog2.pop %v761
        %v763 = vmul.f32 %v762, 0.6931472
        %v764 = vadd.f32 %v756, %v763
        %v765 = vadd.f32 %v764, 0.001
        %v766 = vadd.f32 %v685, %v695
        %v767 = vmul.f32 %v766, 0.5
        %v768 = vmul.f32 %v767, %v661
        %v769 = vadd.f32 %v695, %v705
        %v770 = vmul.f32 %v769, 0.5
        %v771 = vmul.f32 %v770, %v663
        %v772 = vadd.f32 %v768, %v771
        %v773 = vadd.f32 %v705, %v715
        %v774 = vmul.f32 %v773, 0.5
        %v775 = vmul.f32 %v774, %v665
        %v776 = vadd.f32 %v772, %v775
        %v777 = vadd.f32 %v715, %v725
        %v778 = vmul.f32 %v777, 0.5
        %v779 = vmul.f32 %v778, %v667
        %v780 = vadd.f32 %v776, %v779
        %v781 = vadd.f32 %v725, %v735
        %v782 = vmul.f32 %v781, 0.5
        %v783 = vmul.f32 %v782, %v669
        %v784 = vadd.f32 %v780, %v783
        %v785 = vadd.f32 %v735, %v745
        %v786 = vmul.f32 %v785, 0.5
        %v787 = vmul.f32 %v786, %v671
        %v788 = vadd.f32 %v784, %v787
        %v789 = vadd.f32 %v745, %v755
        %v790 = vmul.f32 %v789, 0.5
        %v791 = vmul.f32 %v790, %v673
        %v792 = vadd.f32 %v788, %v791
        %v793 = vadd.f32 %v755, %v765
        %v794 = vmul.f32 %v793, 0.5
        %v795 = vmul.f32 %v794, %v675
        %v796 = vadd.f32 %v792, %v795
        %v797 = vrcp.pop %v796
        %v798 = vmul.f32 %v796, %v797
        %v799 = vsub.f32 2.0, %v798
        %v800 = vmul.f32 %v797, %v799
        %v801 = vmul.f32 %v800, 0.999
        %v802 = vmul.f32 %v685, %v801
        %v803 = vadd.f32 %v802, 0.001
        %v804 = vmul.f32 %v695, %v801
        %v805 = vadd.f32 %v804, 0.001
        %v806 = vmul.f32 %v705, %v801
        %v807 = vadd.f32 %v806, 0.001
        %v808 = vmul.f32 %v715, %v801
        %v809 = vadd.f32 %v808, 0.001
        %v810 = vmul.f32 %v725, %v801
        %v811 = vadd.f32 %v810, 0.001
        %v812 = vmul.f32 %v735, %v801
        %v813 = vadd.f32 %v812, 0.001
        %v814 = vmul.f32 %v745, %v801
        %v815 = vadd.f32 %v814, 0.001
        %v816 = vmul.f32 %v755, %v801
        %v817 = vadd.f32 %v816, 0.001
        %v818 = vmul.f32 %v765, %v801
        %v819 = vadd.f32 %v818, 0.001
        %v820 = vadd.f32 %v661, 0.0
        %vm821 = vcmp.ge.f32.partialorder %v289, %v820
        %vm822 = vmxor %vm821, 1
        %v823 = vsel %vm822, %v661, 0.0
        %v824 = vsel %vm822, %v803, 0.0
        %v825 = vsel %vm822, %v805, 0.0
        %v826 = vadd.f32 %v803, %v805
        %v827 = vmul.f32 %v826, 0.5
        %v828 = vmul.f32 %v827, %v661
        %v829 = vadd.f32 %v828, 0.0
        %v830 = vadd.f32 %v820, %v663
        %vm831 = vcmp.ge.f32.partialorder %v289, %v830
        %vm832 = vmxor %vm831, 1
        %vm833 = vmand %vm821, %vm832
        %v834 = vsel %vm833, %v820, 0.0
        %v835 = vsel %vm833, %v663, %v823
        %v836 = vsel %vm833, %v829, 0.0
        %v837 = vsel %vm833, %v805, %v824
        %v838 = vsel %vm833, %v807, %v825
        %v839 = vadd.f32 %v805, %v807
        %v840 = vmul.f32 %v839, 0.5
        %v841 = vmul.f32 %v840, %v663
        %v842 = vadd.f32 %v829, %v841
        %v843 = vadd.f32 %v830, %v665
        %vm844 = vcmp.ge.f32.partialorder %v289, %v843
        %vm845 = vmxor %vm844, 1
        %vm846 = vmand %vm831, %vm845
        %v847 = vsel %vm846, %v830, %v834
        %v848 = vsel %vm846, %v665, %v835
        %v849 = vsel %vm846, %v842, %v836
        %v850 = vsel %vm846, %v807, %v837
        %v851 = vsel %vm846, %v809, %v838
        %v852 = vadd.f32 %v807, %v809
        %v853 = vmul.f32 %v852, 0.5
        %v854 = vmul.f32 %v853, %v665
        %v855 = vadd.f32 %v842, %v854
        %v856 = vadd.f32 %v843, %v667
        %vm857 = vcmp.ge.f32.partialorder %v289, %v856
        %vm858 = vmxor %vm857, 1
        %vm859 = vmand %vm844, %vm858
        %v860 = vsel %vm859, %v843, %v847
        %v861 = vsel %vm859, %v667, %v848
        %v862 = vsel %vm859, %v855, %v849
        %v863 = vsel %vm859, %v809, %v850
        %v864 = vsel %vm859, %v811, %v851
        %v865 = vadd.f32 %v809, %v811
        %v866 = vmul.f32 %v865, 0.5
        %v867 = vmul.f32 %v866, %v667
        %v868 = vadd.f32 %v855, %v867
        %v869 = vadd.f32 %v856, %v669
        %vm870 = vcmp.ge.f32.partialorder %v289, %v869
        %vm871 = vmxor %vm870, 1
        %vm872 = vmand %vm857, %vm871
        %v873 = vsel %vm872, %v856, %v860
        %v874 = vsel %vm872, %v669, %v861
        %v875 = vsel %vm872, %v868, %v862
        %v876 = vsel %vm872, %v811, %v863
        %v877 = vsel %vm872, %v813, %v864
        %v878 = vadd.f32 %v811, %v813
        %v879 = vmul.f32 %v878, 0.5
        %v880 = vmul.f32 %v879, %v669
        %v881 = vadd.f32 %v868, %v880
        %v882 = vadd.f32 %v869, %v671
        %vm883 = vcmp.ge.f32.partialorder %v289, %v882
        %vm884 = vmxor %vm883, 1
        %vm885 = vmand %vm870, %vm884
        %v886 = vsel %vm885, %v869, %v873
        %v887 = vsel %vm885, %v671, %v874
        %v888 = vsel %vm885, %v881, %v875
        %v889 = vsel %vm885, %v813, %v876
        %v890 = vsel %vm885, %v815, %v877
        %v891 = vadd.f32 %v813, %v815
        %v892 = vmul.f32 %v891, 0.5
        %v893 = vmul.f32 %v892, %v671
        %v894 = vadd.f32 %v881, %v893
        %v895 = vadd.f32 %v882, %v673
        %vm896 = vcmp.ge.f32.partialorder %v289, %v895
        %vm897 = vmxor %vm896, 1
        %vm898 = vmand %vm883, %vm897
        %v899 = vsel %vm898, %v882, %v886
        %v900 = vsel %vm898, %v673, %v887
        %v901 = vsel %vm898, %v894, %v888
        %v902 = vsel %vm898, %v815, %v889
        %v903 = vsel %vm898, %v817, %v890
        %v904 = vadd.f32 %v815, %v817
        %v905 = vmul.f32 %v904, 0.5
        %v906 = vmul.f32 %v905, %v673
        %v907 = vadd.f32 %v894, %v906
        %v908 = vsel %vm896, %v895, %v899
        %v909 = vsel %vm896, %v675, %v900
        %v910 = vsel %vm896, %v907, %v901
        %v911 = vsel %vm896, %v817, %v902
        %v912 = vsel %vm896, %v819, %v903
        %v913 = vsub.f32 %v912, %v911
        %v914 = vmul.f32 %v913, 0.5
        %v915 = vmul.f32 %v914, %v909
        %v916 = vmul.f32 %v911, %v909
        %v917 = vsub.f32 %v289, %v908
        %v918 = vrcp.pop %v909
        %v919 = vmul.f32 %v909, %v918
        %v920 = vsub.f32 2.0, %v919
        %v921 = vmul.f32 %v918, %v920
        %v922 = vmul.f32 %v917, %v921
        %v923 = vmul.f32 %v915, %v922
        %v924 = vmul.f32 %v923, %v922
        %v925 = vmul.f32 %v916, %v922
        %v926 = vadd.f32 %v924, %v925
        %v927 = vadd.f32 %v926, %v910
        %v928 = vmax.f32 %v927, 0.0
        %v929 = vmin.f32 %v928, 1.0
        %v930 = vmul.f32 %v922, %v913
        %v931 = vadd.f32 %v930, %v911
        %v932 = vlog2.pop %v931
        %v933 = vmul.f32 %v932, 0.6931472
        %934 = vst [vmem:[%s278] sm:$0xff] %v929
        %v935 = vrot.slane %v933, 4
        %v936 = vadd.f32 %v933, %v935
        %v937 = vrot.slane %v936, 2
        %v938 = vadd.f32 %v936, %v937
        %v939 = vrot.slane %v938, 1
        %v940 = vadd.f32 %v938, %v939
        %941 = vst [vmem:[%s284] sm:$0x1] %v940
        %s942 = sand.u32 %s125, 1
        %s943 = scalar_lea.sflag [#allocation4], %s942
        %s944 = sand.u32 %s125, 1
        %s945 = smul.addr %s944, 8
        %s946 = scalar_lea.vmem [#allocation3], %s945
        %s947 = sand.u32 %s151, 1
        %s948 = scalar_lea.sflag [#allocation6], %s947
        %s949 = sand.u32 %s151, 1
        %s950 = scalar_lea.vmem [#allocation5], %s949
        // Predicated region
        $region75: #{tpu_custom_call.1} parent=69 // pred_check
          %p951 = pneg %p135
        $region76: #{tpu_custom_call.1} parent=69 // pred_check_branch
          %953 = sbr.rel (%p951) target = $region78
        $region77: #{tpu_custom_call.1} parent=69 // pred_region
          %s955 = ssub.s32 128, 128
          %956 = vsyncadd %s943, %s955
          %s957 = smul.addr %s23, 128
          %s958 = scalar_lea.hbm %s4, %s957
          %s960 = sshll.u32 %s946, 4
          %s961 = int_to_ptr.vmem [resolvable:$true] %s960
          %963 = dma.vmem_to_hbm [thread:$0]  %s961, 128, %s958, %s943
        $region78: #{tpu_custom_call.1} parent=69 // pred_fallthru
          _
        // Predicated region
        $region79: #{tpu_custom_call.1} parent=69 // pred_check
          %p964 = pneg %p161
        $region80: #{tpu_custom_call.1} parent=69 // pred_check_branch
          %966 = sbr.rel (%p964) target = $region82
        $region81: #{tpu_custom_call.1} parent=69 // pred_region
          %s968 = ssub.s32 16, 16
          %969 = vsyncadd %s948, %s968
          %s970 = smul.addr %s23, 16
          %s971 = scalar_lea.hbm %s5, %s970
          %s973 = sshll.u32 %s950, 4
          %s974 = int_to_ptr.vmem [resolvable:$true] %s973
          %976 = dma.vmem_to_hbm [thread:$0]  %s974, 16, %s971, %s948
        $region82: #{tpu_custom_call.1} parent=69 // pred_fallthru
          _
      $region70: #{tpu_custom_call.1} parent=5 // pred_fallthru
        _
      %p977 = scmp.le.s32.totalorder 2, %s18
      // Predicated region
      $region83: #{tpu_custom_call.1} parent=5 // pred_check
        %p978 = pneg %p977
      $region84: #{tpu_custom_call.1} parent=5 // pred_check_branch
        %980 = sbr.rel (%p978) target = $region86
      $region85: #{tpu_custom_call.1} parent=5 // pred_region
        %s981 = ssub.s32 %s18, 2
        // Predicated region
        $region87: #{tpu_custom_call.1} parent=85 // pred_check
          %p982 = pneg %p141
        $region88: #{tpu_custom_call.1} parent=85 // pred_check_branch
          %984 = sbr.rel (%p982) target = $region90
        $region89: #{tpu_custom_call.1} parent=85 // pred_region
          %s985 = sand.u32 %s126, 1
          %s986 = scalar_lea.sflag [#allocation4], %s985
          %s987 = sand.u32 %s126, 1
          %s988 = smul.addr %s987, 8
          %s989 = scalar_lea.vmem [#allocation3], %s988
          %990 = dma.done %s986, 128
        $region90: #{tpu_custom_call.1} parent=85 // pred_fallthru
          _
        // Predicated region
        $region91: #{tpu_custom_call.1} parent=85 // pred_check
          %p991 = pneg %p167
        $region92: #{tpu_custom_call.1} parent=85 // pred_check_branch
          %993 = sbr.rel (%p991) target = $region94
        $region93: #{tpu_custom_call.1} parent=85 // pred_region
          %s994 = sand.u32 %s152, 1
          %s995 = scalar_lea.sflag [#allocation6], %s994
          %s996 = sand.u32 %s152, 1
          %s997 = scalar_lea.vmem [#allocation5], %s996
          %998 = dma.done %s995, 16
        $region94: #{tpu_custom_call.1} parent=85 // pred_fallthru
          _
      $region86: #{tpu_custom_call.1} parent=5 // pred_fallthru
        _
    $region6: #{tpu_custom_call.1} parent=1 // loop_footer
      %s22 = sadd.s32 1, %s18
    $region7: #{tpu_custom_call.1} parent=1 // loop_footer_branch
      %17 = sbr.rel target = $region3
    $region8: #{tpu_custom_call.1} parent=1 // loop_exit
      _
    %999 = vsyncpa [#allocation4], 1
    %s1000 = scalar_lea.sflag [#allocation4], 1
    %1001 = vsyncpa %s1000, 1
    %1002 = vsyncpa [#allocation6], 1
    %s1003 = scalar_lea.sflag [#allocation6], 1
    %1004 = vsyncpa %s1003, 1

</llo_original>
